<compile_context>
chip_gen: v5e
topology: v5e:2x2
jax: 0.10.0
libtpu: 0.0.40
codegen_flags: <defaults>
</compile_context>

<pallas_src>
import jax
import jax.numpy as jnp
from jax.experimental import pallas as pl
from jax.experimental.pallas import tpu as pltpu

# input_feature comes from data.mat in the original script; pick a small
# deterministic value consistent with the model (any F works).
LAYER_DIMS = (16, 64, 256, 1024, 256, 64, 3)  # F -> 64 -> 256 -> 1024 -> 256 -> 64 -> 3


def _round_up(x, m):
    return (x + m - 1) // m * m


def mnn_kernel(x_ref,
               w1, b1, w2, b2, w3, b3, w4, b4, w5, b5, w6, b6,
               o_ref):
    # Fully fused MLP: 5x (bf16 matmul + f32 bias + ReLU), then matmul + bias
    # + sigmoid.  Matmul operands are bf16, accumulation is f32 (MXU native);
    # all elementwise math stays f32.
    h = x_ref[...].astype(jnp.float32)
    for w, b in ((w1, b1), (w2, b2), (w3, b3), (w4, b4), (w5, b5)):
        h = jnp.dot(h.astype(jnp.bfloat16), w[...],
                    preferred_element_type=jnp.float32) + b[...]
        h = jnp.maximum(h, 0.0)  # ReLU
    h = jnp.dot(h.astype(jnp.bfloat16), w6[...],
                preferred_element_type=jnp.float32) + b6[...]
    o_ref[...] = jax.nn.sigmoid(h).astype(o_ref.dtype)


def init_params(key):
    """PyTorch-style init: U(-1/sqrt(fan_in), 1/sqrt(fan_in)), kept in f32.

    Weights are stored [in, out] (transposed vs. nn.Linear) so the kernel
    computes h @ W + b directly on the MXU.  Biases are [1, out] 2-D tiles.
    """
    params = []
    for fan_in, fan_out in zip(LAYER_DIMS[:-1], LAYER_DIMS[1:]):
        key, kw, kb = jax.random.split(key, 3)
        bound = 1.0 / float(fan_in) ** 0.5
        w = jax.random.uniform(kw, (fan_in, fan_out), jnp.float32, -bound, bound)
        b = jax.random.uniform(kb, (1, fan_out), jnp.float32, -bound, bound)
        params.append((w, b))
    return params


def mnn_forward(x, params, *, tm=256):
    """x: [B, F] float32.  Returns sigmoid output [B, 3] in float32.

    tm is the batch tile (sweepable, default 256).  Batch is padded to a
    multiple of the effective tile; small batches use a shrunken tile so the
    demo does not pay for a 256-row pad.
    """
    B, F = x.shape
    assert F == LAYER_DIMS[0]

    # Effective batch tile: 8-aligned, no larger than the (8-aligned) batch.
    tm_eff = min(_round_up(tm, 8), _round_up(B, 8))
    B_pad = _round_up(B, tm_eff)
    if B_pad != B:
        x = jnp.pad(x, ((0, B_pad - B), (0, 0)))

    n_out = LAYER_DIMS[-1]
    n_out_pad = _round_up(n_out, 128)  # lane-dense output stores

    # Weights/biases are resident in VMEM (full-array blocks, constant
    # index_map -> fetched once).  Weights are fed as bf16; biases stay f32.
    flat_args = [x]
    in_specs = [pl.BlockSpec((tm_eff, F), lambda i: (i, 0))]
    flops = 0
    n_layers = len(params)
    for li, (w, b) in enumerate(params):
        if li == n_layers - 1:
            # Zero-pad the final layer to 128 output lanes; padded lanes
            # produce sigmoid(0)=0.5 and are sliced off below.
            w = jnp.pad(w, ((0, 0), (0, n_out_pad - n_out)))
            b = jnp.pad(b, ((0, 0), (0, n_out_pad - n_out)))
        w = w.astype(jnp.bfloat16)
        b = b.astype(jnp.float32)
        in_specs.append(pl.BlockSpec(w.shape, lambda i: (0, 0)))
        in_specs.append(pl.BlockSpec(b.shape, lambda i: (0, 0)))
        flat_args.append(w)
        flat_args.append(b)
        flops += 2 * B_pad * w.shape[0] * w.shape[1]

    bytes_accessed = (
        x.size * x.dtype.itemsize
        + sum(a.size * a.dtype.itemsize for a in flat_args[1:])
        + B_pad * n_out_pad * 4)
    cost = pl.CostEstimate(flops=flops,
                           transcendentals=B_pad * n_out_pad,  # sigmoid exp
                           bytes_accessed=bytes_accessed)

    out = pl.pallas_call(
        mnn_kernel,
        out_shape=jax.ShapeDtypeStruct((B_pad, n_out_pad), jnp.float32),
        grid=(B_pad // tm_eff,),
        in_specs=in_specs,
        out_specs=pl.BlockSpec((tm_eff, n_out_pad), lambda i: (i, 0)),
        compiler_params=pltpu.CompilerParams(
            dimension_semantics=("parallel",)),  # shards blocks across v7x TCs
        cost_estimate=cost,
    )(*flat_args)

    return out[:B, :n_out]


def mnn_reference(x, params):
    """Pure-f32 JAX reference (matches the PyTorch forward)."""
    h = x
    for i, (w, b) in enumerate(params):
        h = h @ w + b
        if i < len(params) - 1:
            h = jnp.maximum(h, 0.0)
    return jax.nn.sigmoid(h)


if __name__ == "__main__":
    key = jax.random.PRNGKey(0)
    key, kx, kp = jax.random.split(key, 3)

    batch = 12  # small; deliberately not a multiple of 8 to exercise padding
    x = jax.random.normal(kx, (batch, LAYER_DIMS[0]), jnp.float32)
    params = init_params(kp)

    out = jax.block_until_ready(mnn_forward(x, params))
    ref = mnn_reference(x, params)

    assert out.shape == (batch, 3), out.shape
    # Kernel uses bf16 matmul operands with f32 accumulation; compare against
    # the pure-f32 reference with a correspondingly relaxed tolerance.
    assert jnp.allclose(out, ref, atol=2e-2, rtol=2e-2), "mismatch vs reference"

    print("KERNEL_OK")
</pallas_src>

<mosaic_0001>
module attributes {stable_mosaic.version = 11 : i64} {
  func.func @mnn_kernel(%arg0: i32, %arg1: memref<16x16xf32, #tpu.memory_space<vmem>>, %arg2: memref<16x64xbf16, #tpu.memory_space<vmem>>, %arg3: memref<1x64xf32, #tpu.memory_space<vmem>>, %arg4: memref<64x256xbf16, #tpu.memory_space<vmem>>, %arg5: memref<1x256xf32, #tpu.memory_space<vmem>>, %arg6: memref<256x1024xbf16, #tpu.memory_space<vmem>>, %arg7: memref<1x1024xf32, #tpu.memory_space<vmem>>, %arg8: memref<1024x256xbf16, #tpu.memory_space<vmem>>, %arg9: memref<1x256xf32, #tpu.memory_space<vmem>>, %arg10: memref<256x64xbf16, #tpu.memory_space<vmem>>, %arg11: memref<1x64xf32, #tpu.memory_space<vmem>>, %arg12: memref<64x128xbf16, #tpu.memory_space<vmem>>, %arg13: memref<1x128xf32, #tpu.memory_space<vmem>>, %arg14: memref<16x128xf32, #tpu.memory_space<vmem>>) attributes {dimension_semantics = [#tpu.dimension_semantics<parallel>], iteration_bounds = array<i64: 1>, scalar_prefetch = 0 : i64, scratch_operands = 0 : i64, tpu.core_type = #tpu.core_type<tc>, window_params = [{transform_indices = @transform_0, window_bounds = array<i64: 16, 16>}, {pipeline_mode = #tpu.pipeline_mode<synchronous>, transform_indices = @transform_1, window_bounds = array<i64: 16, 64>}, {pipeline_mode = #tpu.pipeline_mode<synchronous>, transform_indices = @transform_2, window_bounds = array<i64: 1, 64>}, {pipeline_mode = #tpu.pipeline_mode<synchronous>, transform_indices = @transform_3, window_bounds = array<i64: 64, 256>}, {pipeline_mode = #tpu.pipeline_mode<synchronous>, transform_indices = @transform_4, window_bounds = array<i64: 1, 256>}, {pipeline_mode = #tpu.pipeline_mode<synchronous>, transform_indices = @transform_5, window_bounds = array<i64: 256, 1024>}, {pipeline_mode = #tpu.pipeline_mode<synchronous>, transform_indices = @transform_6, window_bounds = array<i64: 1, 1024>}, {pipeline_mode = #tpu.pipeline_mode<synchronous>, transform_indices = @transform_7, window_bounds = array<i64: 1024, 256>}, {pipeline_mode = #tpu.pipeline_mode<synchronous>, transform_indices = @transform_8, window_bounds = array<i64: 1, 256>}, {pipeline_mode = #tpu.pipeline_mode<synchronous>, transform_indices = @transform_9, window_bounds = array<i64: 256, 64>}, {pipeline_mode = #tpu.pipeline_mode<synchronous>, transform_indices = @transform_10, window_bounds = array<i64: 1, 64>}, {pipeline_mode = #tpu.pipeline_mode<synchronous>, transform_indices = @transform_11, window_bounds = array<i64: 64, 128>}, {pipeline_mode = #tpu.pipeline_mode<synchronous>, transform_indices = @transform_12, window_bounds = array<i64: 1, 128>}, {transform_indices = @transform_13, window_bounds = array<i64: 16, 128>}]} {
    %c0 = arith.constant 0 : index
    %c0_0 = arith.constant 0 : index
    %0 = vector.load %arg1[%c0, %c0_0] : memref<16x16xf32, #tpu.memory_space<vmem>>, vector<16x16xf32>
    %1 = arith.truncf %0 : vector<16x16xf32> to vector<16x16xbf16>
    %c0_1 = arith.constant 0 : index
    %c0_2 = arith.constant 0 : index
    %2 = vector.load %arg2[%c0_1, %c0_2] : memref<16x64xbf16, #tpu.memory_space<vmem>>, vector<16x64xbf16>
    %cst = arith.constant dense<0.000000e+00> : vector<16x64xf32>
    %3 = tpu.matmul %1, %2, %cst {dimension_numbers = #tpu.dot_dimension_numbers<[1], [0], [0], [1], [0, 0, 1, 1], [], []>} : vector<16x16xbf16>, vector<16x64xbf16>, vector<16x64xf32> -> vector<16x64xf32>
    %c0_3 = arith.constant 0 : index
    %c0_4 = arith.constant 0 : index
    %4 = vector.load %arg3[%c0_3, %c0_4] : memref<1x64xf32, #tpu.memory_space<vmem>>, vector<1x64xf32>
    %5 = vector.broadcast %4 : vector<1x64xf32> to vector<16x64xf32>
    %6 = arith.addf %3, %5 : vector<16x64xf32>
    %cst_5 = arith.constant 0.000000e+00 : f32
    %7 = vector.broadcast %cst_5 : f32 to vector<16x64xf32>
    %8 = arith.maximumf %6, %7 : vector<16x64xf32>
    %9 = arith.truncf %8 : vector<16x64xf32> to vector<16x64xbf16>
    %c0_6 = arith.constant 0 : index
    %c0_7 = arith.constant 0 : index
    %10 = vector.load %arg4[%c0_6, %c0_7] : memref<64x256xbf16, #tpu.memory_space<vmem>>, vector<64x256xbf16>
    %cst_8 = arith.constant dense<0.000000e+00> : vector<16x256xf32>
    %11 = tpu.matmul %9, %10, %cst_8 {dimension_numbers = #tpu.dot_dimension_numbers<[1], [0], [0], [1], [0, 0, 1, 1], [], []>} : vector<16x64xbf16>, vector<64x256xbf16>, vector<16x256xf32> -> vector<16x256xf32>
    %c0_9 = arith.constant 0 : index
    %c0_10 = arith.constant 0 : index
    %12 = vector.load %arg5[%c0_9, %c0_10] : memref<1x256xf32, #tpu.memory_space<vmem>>, vector<1x256xf32>
    %13 = vector.broadcast %12 : vector<1x256xf32> to vector<16x256xf32>
    %14 = arith.addf %11, %13 : vector<16x256xf32>
    %cst_11 = arith.constant 0.000000e+00 : f32
    %15 = vector.broadcast %cst_11 : f32 to vector<16x256xf32>
    %16 = arith.maximumf %14, %15 : vector<16x256xf32>
    %17 = arith.truncf %16 : vector<16x256xf32> to vector<16x256xbf16>
    %c0_12 = arith.constant 0 : index
    %c0_13 = arith.constant 0 : index
    %18 = vector.load %arg6[%c0_12, %c0_13] : memref<256x1024xbf16, #tpu.memory_space<vmem>>, vector<256x1024xbf16>
    %cst_14 = arith.constant dense<0.000000e+00> : vector<16x1024xf32>
    %19 = tpu.matmul %17, %18, %cst_14 {dimension_numbers = #tpu.dot_dimension_numbers<[1], [0], [0], [1], [0, 0, 1, 1], [], []>} : vector<16x256xbf16>, vector<256x1024xbf16>, vector<16x1024xf32> -> vector<16x1024xf32>
    %c0_15 = arith.constant 0 : index
    %c0_16 = arith.constant 0 : index
    %20 = vector.load %arg7[%c0_15, %c0_16] : memref<1x1024xf32, #tpu.memory_space<vmem>>, vector<1x1024xf32>
    %21 = vector.broadcast %20 : vector<1x1024xf32> to vector<16x1024xf32>
    %22 = arith.addf %19, %21 : vector<16x1024xf32>
    %cst_17 = arith.constant 0.000000e+00 : f32
    %23 = vector.broadcast %cst_17 : f32 to vector<16x1024xf32>
    %24 = arith.maximumf %22, %23 : vector<16x1024xf32>
    %25 = arith.truncf %24 : vector<16x1024xf32> to vector<16x1024xbf16>
    %c0_18 = arith.constant 0 : index
    %c0_19 = arith.constant 0 : index
    %26 = vector.load %arg8[%c0_18, %c0_19] : memref<1024x256xbf16, #tpu.memory_space<vmem>>, vector<1024x256xbf16>
    %cst_20 = arith.constant dense<0.000000e+00> : vector<16x256xf32>
    %27 = tpu.matmul %25, %26, %cst_20 {dimension_numbers = #tpu.dot_dimension_numbers<[1], [0], [0], [1], [0, 0, 1, 1], [], []>} : vector<16x1024xbf16>, vector<1024x256xbf16>, vector<16x256xf32> -> vector<16x256xf32>
    %c0_21 = arith.constant 0 : index
    %c0_22 = arith.constant 0 : index
    %28 = vector.load %arg9[%c0_21, %c0_22] : memref<1x256xf32, #tpu.memory_space<vmem>>, vector<1x256xf32>
    %29 = vector.broadcast %28 : vector<1x256xf32> to vector<16x256xf32>
    %30 = arith.addf %27, %29 : vector<16x256xf32>
    %cst_23 = arith.constant 0.000000e+00 : f32
    %31 = vector.broadcast %cst_23 : f32 to vector<16x256xf32>
    %32 = arith.maximumf %30, %31 : vector<16x256xf32>
    %33 = arith.truncf %32 : vector<16x256xf32> to vector<16x256xbf16>
    %c0_24 = arith.constant 0 : index
    %c0_25 = arith.constant 0 : index
    %34 = vector.load %arg10[%c0_24, %c0_25] : memref<256x64xbf16, #tpu.memory_space<vmem>>, vector<256x64xbf16>
    %cst_26 = arith.constant dense<0.000000e+00> : vector<16x64xf32>
    %35 = tpu.matmul %33, %34, %cst_26 {dimension_numbers = #tpu.dot_dimension_numbers<[1], [0], [0], [1], [0, 0, 1, 1], [], []>} : vector<16x256xbf16>, vector<256x64xbf16>, vector<16x64xf32> -> vector<16x64xf32>
    %c0_27 = arith.constant 0 : index
    %c0_28 = arith.constant 0 : index
    %36 = vector.load %arg11[%c0_27, %c0_28] : memref<1x64xf32, #tpu.memory_space<vmem>>, vector<1x64xf32>
    %37 = vector.broadcast %36 : vector<1x64xf32> to vector<16x64xf32>
    %38 = arith.addf %35, %37 : vector<16x64xf32>
    %cst_29 = arith.constant 0.000000e+00 : f32
    %39 = vector.broadcast %cst_29 : f32 to vector<16x64xf32>
    %40 = arith.maximumf %38, %39 : vector<16x64xf32>
    %41 = arith.truncf %40 : vector<16x64xf32> to vector<16x64xbf16>
    %c0_30 = arith.constant 0 : index
    %c0_31 = arith.constant 0 : index
    %42 = vector.load %arg12[%c0_30, %c0_31] : memref<64x128xbf16, #tpu.memory_space<vmem>>, vector<64x128xbf16>
    %cst_32 = arith.constant dense<0.000000e+00> : vector<16x128xf32>
    %43 = tpu.matmul %41, %42, %cst_32 {dimension_numbers = #tpu.dot_dimension_numbers<[1], [0], [0], [1], [0, 0, 1, 1], [], []>} : vector<16x64xbf16>, vector<64x128xbf16>, vector<16x128xf32> -> vector<16x128xf32>
    %c0_33 = arith.constant 0 : index
    %c0_34 = arith.constant 0 : index
    %44 = vector.load %arg13[%c0_33, %c0_34] : memref<1x128xf32, #tpu.memory_space<vmem>>, vector<1x128xf32>
    %45 = vector.broadcast %44 : vector<1x128xf32> to vector<16x128xf32>
    %46 = arith.addf %43, %45 : vector<16x128xf32>
    %47 = arith.negf %46 : vector<16x128xf32>
    %48 = math.exp %47 : vector<16x128xf32>
    %cst_35 = arith.constant 1.000000e+00 : f32
    %49 = vector.broadcast %cst_35 : f32 to vector<16x128xf32>
    %50 = arith.addf %49, %48 : vector<16x128xf32>
    %51 = arith.divf %49, %50 : vector<16x128xf32>
    %c0_36 = arith.constant 0 : index
    %c0_37 = arith.constant 0 : index
    %52 = vector.load %arg14[%c0_36, %c0_37] : memref<16x128xf32, #tpu.memory_space<vmem>>, vector<16x128xf32>
    tpu.vector_store %arg14[%c0_36, %c0_37], %51 {strides = array<i32>} : memref<16x128xf32, #tpu.memory_space<vmem>>, vector<16x128xf32>,
    return
  }
  func.func @transform_0(%arg0: i32) -> (i32, i32) {
    %c0_i32 = arith.constant 0 : i32
    %c0_i32_0 = arith.constant 0 : i32
    return %arg0, %c0_i32 : i32, i32
  }
  func.func @transform_1(%arg0: i32) -> (i32, i32) {
    %c0_i32 = arith.constant 0 : i32
    %c0_i32_0 = arith.constant 0 : i32
    %c0_i32_1 = arith.constant 0 : i32
    return %c0_i32, %c0_i32_0 : i32, i32
  }
  func.func @transform_2(%arg0: i32) -> (i32, i32) {
    %c0_i32 = arith.constant 0 : i32
    %c0_i32_0 = arith.constant 0 : i32
    %c0_i32_1 = arith.constant 0 : i32
    return %c0_i32, %c0_i32_0 : i32, i32
  }
  func.func @transform_3(%arg0: i32) -> (i32, i32) {
    %c0_i32 = arith.constant 0 : i32
    %c0_i32_0 = arith.constant 0 : i32
    %c0_i32_1 = arith.constant 0 : i32
    return %c0_i32, %c0_i32_0 : i32, i32
  }
  func.func @transform_4(%arg0: i32) -> (i32, i32) {
    %c0_i32 = arith.constant 0 : i32
    %c0_i32_0 = arith.constant 0 : i32
    %c0_i32_1 = arith.constant 0 : i32
    return %c0_i32, %c0_i32_0 : i32, i32
  }
  func.func @transform_5(%arg0: i32) -> (i32, i32) {
    %c0_i32 = arith.constant 0 : i32
    %c0_i32_0 = arith.constant 0 : i32
    %c0_i32_1 = arith.constant 0 : i32
    return %c0_i32, %c0_i32_0 : i32, i32
  }
  func.func @transform_6(%arg0: i32) -> (i32, i32) {
    %c0_i32 = arith.constant 0 : i32
    %c0_i32_0 = arith.constant 0 : i32
    %c0_i32_1 = arith.constant 0 : i32
    return %c0_i32, %c0_i32_0 : i32, i32
  }
  func.func @transform_7(%arg0: i32) -> (i32, i32) {
    %c0_i32 = arith.constant 0 : i32
    %c0_i32_0 = arith.constant 0 : i32
    %c0_i32_1 = arith.constant 0 : i32
    return %c0_i32, %c0_i32_0 : i32, i32
  }
  func.func @transform_8(%arg0: i32) -> (i32, i32) {
    %c0_i32 = arith.constant 0 : i32
    %c0_i32_0 = arith.constant 0 : i32
    %c0_i32_1 = arith.constant 0 : i32
    return %c0_i32, %c0_i32_0 : i32, i32
  }
  func.func @transform_9(%arg0: i32) -> (i32, i32) {
    %c0_i32 = arith.constant 0 : i32
    %c0_i32_0 = arith.constant 0 : i32
    %c0_i32_1 = arith.constant 0 : i32
    return %c0_i32, %c0_i32_0 : i32, i32
  }
  func.func @transform_10(%arg0: i32) -> (i32, i32) {
    %c0_i32 = arith.constant 0 : i32
    %c0_i32_0 = arith.constant 0 : i32
    %c0_i32_1 = arith.constant 0 : i32
    return %c0_i32, %c0_i32_0 : i32, i32
  }
  func.func @transform_11(%arg0: i32) -> (i32, i32) {
    %c0_i32 = arith.constant 0 : i32
    %c0_i32_0 = arith.constant 0 : i32
    %c0_i32_1 = arith.constant 0 : i32
    return %c0_i32, %c0_i32_0 : i32, i32
  }
  func.func @transform_12(%arg0: i32) -> (i32, i32) {
    %c0_i32 = arith.constant 0 : i32
    %c0_i32_0 = arith.constant 0 : i32
    %c0_i32_1 = arith.constant 0 : i32
    return %c0_i32, %c0_i32_0 : i32, i32
  }
  func.func @transform_13(%arg0: i32) -> (i32, i32) {
    %c0_i32 = arith.constant 0 : i32
    %c0_i32_0 = arith.constant 0 : i32
    return %arg0, %c0_i32 : i32, i32
  }
}

</mosaic_0001>

<llo_original>
// kernel: tpu_custom_call.1
$region0: #{tpu_custom_call.1}
  #allocation0 [shape = 'u32[]', space=smem, size = 0x4, offset = 0x4, fixed_abs, tag = 'smem constant byte address 0x4 - core index']
  #allocation1 [shape = 'u32[72,128]{1,0:T(1,128)}', space=vmem, size = 0x9000, scoped, tag = 'internal scratch']
  %s0 = inlined_call_operand.vmem [shape: f32[16,16], index: 0, kind: input, shape index: {}]
  %s1 = inlined_call_operand.vmem [shape: bf16[16,64], index: 1, kind: input, shape index: {}]
  %s2 = inlined_call_operand.vmem [shape: f32[1,64], index: 2, kind: input, shape index: {}]
  %s3 = inlined_call_operand.vmem [shape: bf16[64,256], index: 3, kind: input, shape index: {}]
  %s4 = inlined_call_operand.vmem [shape: f32[1,256], index: 4, kind: input, shape index: {}]
  %s5 = inlined_call_operand.hbm [shape: bf16[256,1024], index: 5, kind: input, shape index: {}]
  %s6 = inlined_call_operand.vmem [shape: f32[1,1024], index: 6, kind: input, shape index: {}]
  %s7 = inlined_call_operand.hbm [shape: bf16[1024,256], index: 7, kind: input, shape index: {}]
  %s8 = inlined_call_operand.vmem [shape: f32[1,256], index: 8, kind: input, shape index: {}]
  %s9 = inlined_call_operand.vmem [shape: bf16[256,64], index: 9, kind: input, shape index: {}]
  %s10 = inlined_call_operand.vmem [shape: f32[1,64], index: 10, kind: input, shape index: {}]
  %s11 = inlined_call_operand.vmem [shape: bf16[64,128], index: 11, kind: input, shape index: {}]
  %s12 = inlined_call_operand.vmem [shape: f32[1,128], index: 12, kind: input, shape index: {}]
  %s13 = inlined_call_operand.hbm [shape: f32[16,128], index: 13, kind: output, shape index: {}]
  %s14 = sld [smem:[#allocation0]]
  $region70: #{tpu_custom_call.1} parent=0
    _
  %s16 = ssub.s32 1, %s14
  %s17 = scalar_select 0, %s16, %s14
  $region1: #{tpu_custom_call.1} parent=0
    #allocation2 [shape = 'u8[524288]{0}', space=vmem, size = 0x80000, scoped, tag = 'input window, operand 5, single buffered']
    #allocation3 [shape = 's32[1]{0}', space=sflag, size = 0x4, scoped, tag = 'scoped memory for tpu_custom_call.1']
    #allocation4 [shape = 's32[1]{0}', space=sflag, size = 0x4, scoped, tag = 'scoped memory for tpu_custom_call.1']
    #allocation5 [shape = 'u8[524288]{0}', space=vmem, size = 0x80000, scoped, tag = 'input window, operand 7, single buffered']
    #allocation6 [shape = 's32[1]{0}', space=sflag, size = 0x4, scoped, tag = 'scoped memory for tpu_custom_call.1']
    #allocation7 [shape = 'u8[8192]{0}', space=vmem, size = 0x2000, scoped, tag = 'output window, operand 0, single buffered']
    %18 = vsyncpa [#allocation3], 0
    %19 = vsyncpa [#allocation6], 0
    %20 = vsyncpa [#allocation4], 0
    // Predicated region
    $region2: #{tpu_custom_call.1} parent=1 // pred_check
      _
    $region3: #{tpu_custom_call.1} parent=1 // pred_check_branch
      %22 = sbr.rel (0) target = $region5
    $region4: #{tpu_custom_call.1} parent=1 // pred_region
      _
    $region5: #{tpu_custom_call.1} parent=1 // pred_fallthru
      _
    // Predicated region
    $region6: #{tpu_custom_call.1} parent=1 // pred_check
      _
    $region7: #{tpu_custom_call.1} parent=1 // pred_check_branch
      %24 = sbr.rel (0) target = $region9
    $region8: #{tpu_custom_call.1} parent=1 // pred_region
      _
    $region9: #{tpu_custom_call.1} parent=1 // pred_fallthru
      _
    // Predicated region
    $region10: #{tpu_custom_call.1} parent=1 // pred_check
      _
    $region11: #{tpu_custom_call.1} parent=1 // pred_check_branch
      %26 = sbr.rel (0) target = $region13
    $region12: #{tpu_custom_call.1} parent=1 // pred_region
      _
    $region13: #{tpu_custom_call.1} parent=1 // pred_fallthru
      _
    // Predicated region
    $region14: #{tpu_custom_call.1} parent=1 // pred_check
      _
    $region15: #{tpu_custom_call.1} parent=1 // pred_check_branch
      %28 = sbr.rel (0) target = $region17
    $region16: #{tpu_custom_call.1} parent=1 // pred_region
      _
    $region17: #{tpu_custom_call.1} parent=1 // pred_fallthru
      _
    // Predicated region
    $region18: #{tpu_custom_call.1} parent=1 // pred_check
      _
    $region19: #{tpu_custom_call.1} parent=1 // pred_check_branch
      %30 = sbr.rel (0) target = $region21
    $region20: #{tpu_custom_call.1} parent=1 // pred_region
      _
    $region21: #{tpu_custom_call.1} parent=1 // pred_fallthru
      _
    // Predicated region
    $region22: #{tpu_custom_call.1} parent=1 // pred_check
      _
    $region23: #{tpu_custom_call.1} parent=1 // pred_check_branch
      %32 = sbr.rel (0) target = $region25
    $region24: #{tpu_custom_call.1} parent=1 // pred_region
      %34 = vsyncadd [#allocation3], 0
      %s35 = sshll.u32 %s5, 4
      %s36 = int_to_ptr.hbm [resolvable:$true] %s35
      %s37 = sshll.u32 [#allocation2], 4
      %s38 = int_to_ptr.vmem [resolvable:$true] %s37
      %43 = dma.hbm_to_vmem [thread:$0]  %s36, 16384, %s38, [#allocation3], 512, 512, 32
    $region25: #{tpu_custom_call.1} parent=1 // pred_fallthru
      _
    // Predicated region
    $region26: #{tpu_custom_call.1} parent=1 // pred_check
      _
    $region27: #{tpu_custom_call.1} parent=1 // pred_check_branch
      %45 = sbr.rel (0) target = $region29
    $region28: #{tpu_custom_call.1} parent=1 // pred_region
      _
    $region29: #{tpu_custom_call.1} parent=1 // pred_fallthru
      _
    // Predicated region
    $region30: #{tpu_custom_call.1} parent=1 // pred_check
      _
    $region31: #{tpu_custom_call.1} parent=1 // pred_check_branch
      %47 = sbr.rel (0) target = $region33
    $region32: #{tpu_custom_call.1} parent=1 // pred_region
      %49 = vsyncadd [#allocation6], 0
      %s50 = sshll.u32 %s7, 4
      %s51 = int_to_ptr.hbm [resolvable:$true] %s50
      %s52 = sshll.u32 [#allocation5], 4
      %s53 = int_to_ptr.vmem [resolvable:$true] %s52
      %58 = dma.hbm_to_vmem [thread:$0]  %s51, 16384, %s53, [#allocation6], 128, 128, 8
    $region33: #{tpu_custom_call.1} parent=1 // pred_fallthru
      _
    // Predicated region
    $region34: #{tpu_custom_call.1} parent=1 // pred_check
      _
    $region35: #{tpu_custom_call.1} parent=1 // pred_check_branch
      %60 = sbr.rel (0) target = $region37
    $region36: #{tpu_custom_call.1} parent=1 // pred_region
      _
    $region37: #{tpu_custom_call.1} parent=1 // pred_fallthru
      _
    // Predicated region
    $region38: #{tpu_custom_call.1} parent=1 // pred_check
      _
    $region39: #{tpu_custom_call.1} parent=1 // pred_check_branch
      %62 = sbr.rel (0) target = $region41
    $region40: #{tpu_custom_call.1} parent=1 // pred_region
      _
    $region41: #{tpu_custom_call.1} parent=1 // pred_fallthru
      _
    // Predicated region
    $region42: #{tpu_custom_call.1} parent=1 // pred_check
      _
    $region43: #{tpu_custom_call.1} parent=1 // pred_check_branch
      %64 = sbr.rel (0) target = $region45
    $region44: #{tpu_custom_call.1} parent=1 // pred_region
      _
    $region45: #{tpu_custom_call.1} parent=1 // pred_fallthru
      _
    // Predicated region
    $region46: #{tpu_custom_call.1} parent=1 // pred_check
      _
    $region47: #{tpu_custom_call.1} parent=1 // pred_check_branch
      %66 = sbr.rel (0) target = $region49
    $region48: #{tpu_custom_call.1} parent=1 // pred_region
      _
    $region49: #{tpu_custom_call.1} parent=1 // pred_fallthru
      _
    // Predicated region
    $region50: #{tpu_custom_call.1} parent=1 // pred_check
      _
    $region51: #{tpu_custom_call.1} parent=1 // pred_check_branch
      %68 = sbr.rel (0) target = $region53
    $region52: #{tpu_custom_call.1} parent=1 // pred_region
      _
    $region53: #{tpu_custom_call.1} parent=1 // pred_fallthru
      _
    // Predicated region
    $region54: #{tpu_custom_call.1} parent=1 // pred_check
      _
    $region55: #{tpu_custom_call.1} parent=1 // pred_check_branch
      %70 = sbr.rel (0) target = $region57
    $region56: #{tpu_custom_call.1} parent=1 // pred_region
      %72 = dma.done [#allocation3], 16384
    $region57: #{tpu_custom_call.1} parent=1 // pred_fallthru
      _
    // Predicated region
    $region58: #{tpu_custom_call.1} parent=1 // pred_check
      _
    $region59: #{tpu_custom_call.1} parent=1 // pred_check_branch
      %74 = sbr.rel (0) target = $region61
    $region60: #{tpu_custom_call.1} parent=1 // pred_region
      %76 = dma.done [#allocation6], 16384
    $region61: #{tpu_custom_call.1} parent=1 // pred_fallthru
      _
    %v78 = vld [vmem:[%s0] sm:$0xff]
    %v79 = vld [vmem:[%s0 + $0x8] sm:$0xff]
    %v80 = vpack.c.bf16 %v79, %v78
    %v81 = vld [vmem:[%s1] sm:$0xf]
    %v82 = vld [vmem:[%s1 + $0x4] sm:$0xf]
    %v83 = vld [vmem:[%s2] sm:$0x1]
    %v85 = vperm.slane %v83, 0
    %v89 = vunpack.c.l.b16 %v81
    %v90 = vunpack.c.l.b16 %v82
    %v91 = vpack.c.b16 %v90, %v89
    %vm93 = vcmask 130048
    %v95 = vsel %vm93, %v80, 0
    %97 = vmatpush.bf16.msra.mxu0 0
    %98 = vmatpush.bf16.msra.mxu0 0
    %99 = vmatpush.bf16.msra.mxu0 0
    %100 = vmatpush.bf16.msra.mxu0 0
    %101 = vmatpush.bf16.msra.mxu0 0
    %102 = vmatpush.bf16.msra.mxu0 0
    %103 = vmatpush.bf16.msra.mxu0 0
    %104 = vmatpush.bf16.msra.mxu0 %v91
    %105 = vmatmul.bf16.gmra.mxu0 %v95
    %v106 = vpop.f32.mrf.mxu0
    %v107 = vadd.f32 %v85, %v106
    %v108 = vpop.f32.mrf.mxu0
    %v109 = vadd.f32 %v85, %v108
    %110 = vdwg.mxu0
    %v111 = vmax.f32 %v107, 0.0
    %v112 = vmax.f32 %v109, 0.0
    %v113 = vpack.c.bf16 %v112, %v111
    %v114 = vld [vmem:[%s3] sm:$0xff]
    %v115 = vld [vmem:[%s3 + $0x8] sm:$0xff]
    %v116 = vld [vmem:[%s3 + $0x10] sm:$0xff]
    %v117 = vld [vmem:[%s3 + $0x18] sm:$0xff]
    %v118 = vld [vmem:[%s3 + $0x20] sm:$0xff]
    %v119 = vld [vmem:[%s3 + $0x28] sm:$0xff]
    %v120 = vld [vmem:[%s3 + $0x30] sm:$0xff]
    %v121 = vld [vmem:[%s3 + $0x38] sm:$0xff]
    %v122 = vld [vmem:[%s4] sm:$0x3]
    %v124 = vperm.slane %v122, 0
    %v125 = vperm.slane %v122, 1
    %v136 = vunpack.c.l.b16 %v114
    %v137 = vunpack.c.h.b16 %v114
    %v138 = vunpack.c.l.b16 %v115
    %v139 = vunpack.c.h.b16 %v115
    %v140 = vunpack.c.l.b16 %v116
    %v141 = vunpack.c.h.b16 %v116
    %v142 = vunpack.c.l.b16 %v117
    %v143 = vunpack.c.h.b16 %v117
    %v144 = vunpack.c.l.b16 %v118
    %v145 = vunpack.c.h.b16 %v118
    %v146 = vunpack.c.l.b16 %v119
    %v147 = vunpack.c.h.b16 %v119
    %v148 = vunpack.c.l.b16 %v120
    %v149 = vunpack.c.h.b16 %v120
    %v150 = vunpack.c.l.b16 %v121
    %v151 = vunpack.c.h.b16 %v121
    %v152 = vpack.c.b16 %v138, %v136
    %v153 = vpack.c.b16 %v139, %v137
    %v154 = vpack.c.b16 %v142, %v140
    %v155 = vpack.c.b16 %v143, %v141
    %v156 = vpack.c.b16 %v146, %v144
    %v157 = vpack.c.b16 %v147, %v145
    %v158 = vpack.c.b16 %v150, %v148
    %v159 = vpack.c.b16 %v151, %v149
    %vm168 = vcmask 523264
    %v170 = vsel %vm168, %v113, 0
    %172 = vmatpush.bf16.msra.mxu0 0
    %173 = vmatpush.bf16.msra.mxu0 0
    %174 = vmatpush.bf16.msra.mxu0 0
    %175 = vmatpush.bf16.msra.mxu0 0
    %176 = vmatpush.bf16.msra.mxu0 %v158
    %177 = vmatpush.bf16.msra.mxu0 %v156
    %178 = vmatpush.bf16.msra.mxu0 %v154
    %179 = vmatpush.bf16.msra.mxu0 %v152
    %180 = vmatmul.bf16.gmra.mxu0 %v170
    %v181 = vpop.f32.mrf.mxu0
    %v182 = vadd.f32 %v124, %v181
    %v183 = vpop.f32.mrf.mxu0
    %v184 = vadd.f32 %v124, %v183
    %185 = vdwg.mxu0
    %186 = vmatpush.bf16.msra.mxu0 0
    %187 = vmatpush.bf16.msra.mxu0 0
    %188 = vmatpush.bf16.msra.mxu0 0
    %189 = vmatpush.bf16.msra.mxu0 0
    %190 = vmatpush.bf16.msra.mxu0 %v159
    %191 = vmatpush.bf16.msra.mxu0 %v157
    %192 = vmatpush.bf16.msra.mxu0 %v155
    %193 = vmatpush.bf16.msra.mxu0 %v153
    %194 = vmatmul.bf16.gmra.mxu0 %v170
    %v195 = vpop.f32.mrf.mxu0
    %v196 = vadd.f32 %v125, %v195
    %v197 = vpop.f32.mrf.mxu0
    %v198 = vadd.f32 %v125, %v197
    %199 = vdwg.mxu0
    %v200 = vmax.f32 %v182, 0.0
    %v201 = vmax.f32 %v196, 0.0
    %v202 = vmax.f32 %v184, 0.0
    %v203 = vmax.f32 %v198, 0.0
    %v204 = vpack.c.bf16 %v202, %v200
    %v205 = vpack.c.bf16 %v203, %v201
    %v206 = vld [vmem:[#allocation2] sm:$0xff]
    %v207 = vld [vmem:[#allocation2 + $0x8] sm:$0xff]
    %v208 = vld [vmem:[#allocation2 + $0x10] sm:$0xff]
    %v209 = vld [vmem:[#allocation2 + $0x18] sm:$0xff]
    %v210 = vld [vmem:[#allocation2 + $0x20] sm:$0xff]
    %v211 = vld [vmem:[#allocation2 + $0x28] sm:$0xff]
    %v212 = vld [vmem:[#allocation2 + $0x30] sm:$0xff]
    %v213 = vld [vmem:[#allocation2 + $0x38] sm:$0xff]
    %v214 = vld [vmem:[#allocation2 + $0x40] sm:$0xff]
    %v215 = vld [vmem:[#allocation2 + $0x48] sm:$0xff]
    %v216 = vld [vmem:[#allocation2 + $0x50] sm:$0xff]
    %v217 = vld [vmem:[#allocation2 + $0x58] sm:$0xff]
    %v218 = vld [vmem:[#allocation2 + $0x60] sm:$0xff]
    %v219 = vld [vmem:[#allocation2 + $0x68] sm:$0xff]
    %v220 = vld [vmem:[#allocation2 + $0x70] sm:$0xff]
    %v221 = vld [vmem:[#allocation2 + $0x78] sm:$0xff]
    %v222 = vld [vmem:[#allocation2 + $0x80] sm:$0xff]
    %v223 = vld [vmem:[#allocation2 + $0x88] sm:$0xff]
    %v224 = vld [vmem:[#allocation2 + $0x90] sm:$0xff]
    %v225 = vld [vmem:[#allocation2 + $0x98] sm:$0xff]
    %v226 = vld [vmem:[#allocation2 + $0xa0] sm:$0xff]
    %v227 = vld [vmem:[#allocation2 + $0xa8] sm:$0xff]
    %v228 = vld [vmem:[#allocation2 + $0xb0] sm:$0xff]
    %v229 = vld [vmem:[#allocation2 + $0xb8] sm:$0xff]
    %v230 = vld [vmem:[#allocation2 + $0xc0] sm:$0xff]
    %v231 = vld [vmem:[#allocation2 + $0xc8] sm:$0xff]
    %v232 = vld [vmem:[#allocation2 + $0xd0] sm:$0xff]
    %v233 = vld [vmem:[#allocation2 + $0xd8] sm:$0xff]
    %v234 = vld [vmem:[#allocation2 + $0xe0] sm:$0xff]
    %v235 = vld [vmem:[#allocation2 + $0xe8] sm:$0xff]
    %v236 = vld [vmem:[#allocation2 + $0xf0] sm:$0xff]
    %v237 = vld [vmem:[#allocation2 + $0xf8] sm:$0xff]
    %v238 = vld [vmem:[#allocation2 + $0x100] sm:$0xff]
    %v239 = vld [vmem:[#allocation2 + $0x108] sm:$0xff]
    %v240 = vld [vmem:[#allocation2 + $0x110] sm:$0xff]
    %v241 = vld [vmem:[#allocation2 + $0x118] sm:$0xff]
    %v242 = vld [vmem:[#allocation2 + $0x120] sm:$0xff]
    %v243 = vld [vmem:[#allocation2 + $0x128] sm:$0xff]
    %v244 = vld [vmem:[#allocation2 + $0x130] sm:$0xff]
    %v245 = vld [vmem:[#allocation2 + $0x138] sm:$0xff]
    %v246 = vld [vmem:[#allocation2 + $0x140] sm:$0xff]
    %v247 = vld [vmem:[#allocation2 + $0x148] sm:$0xff]
    %v248 = vld [vmem:[#allocation2 + $0x150] sm:$0xff]
    %v249 = vld [vmem:[#allocation2 + $0x158] sm:$0xff]
    %v250 = vld [vmem:[#allocation2 + $0x160] sm:$0xff]
    %v251 = vld [vmem:[#allocation2 + $0x168] sm:$0xff]
    %v252 = vld [vmem:[#allocation2 + $0x170] sm:$0xff]
    %v253 = vld [vmem:[#allocation2 + $0x178] sm:$0xff]
    %v254 = vld [vmem:[#allocation2 + $0x180] sm:$0xff]
    %v255 = vld [vmem:[#allocation2 + $0x188] sm:$0xff]
    %v256 = vld [vmem:[#allocation2 + $0x190] sm:$0xff]
    %v257 = vld [vmem:[#allocation2 + $0x198] sm:$0xff]
    %v258 = vld [vmem:[#allocation2 + $0x1a0] sm:$0xff]
    %v259 = vld [vmem:[#allocation2 + $0x1a8] sm:$0xff]
    %v260 = vld [vmem:[#allocation2 + $0x1b0] sm:$0xff]
    %v261 = vld [vmem:[#allocation2 + $0x1b8] sm:$0xff]
    %v262 = vld [vmem:[#allocation2 + $0x1c0] sm:$0xff]
    %v263 = vld [vmem:[#allocation2 + $0x1c8] sm:$0xff]
    %v264 = vld [vmem:[#allocation2 + $0x1d0] sm:$0xff]
    %v265 = vld [vmem:[#allocation2 + $0x1d8] sm:$0xff]
    %v266 = vld [vmem:[#allocation2 + $0x1e0] sm:$0xff]
    %v267 = vld [vmem:[#allocation2 + $0x1e8] sm:$0xff]
    %v268 = vld [vmem:[#allocation2 + $0x1f0] sm:$0xff]
    %v269 = vld [vmem:[#allocation2 + $0x1f8] sm:$0xff]
    %v270 = vld [vmem:[#allocation2 + $0x200] sm:$0xff]
    %v271 = vld [vmem:[#allocation2 + $0x208] sm:$0xff]
    %v272 = vld [vmem:[#allocation2 + $0x210] sm:$0xff]
    %v273 = vld [vmem:[#allocation2 + $0x218] sm:$0xff]
    %v274 = vld [vmem:[#allocation2 + $0x220] sm:$0xff]
    %v275 = vld [vmem:[#allocation2 + $0x228] sm:$0xff]
    %v276 = vld [vmem:[#allocation2 + $0x230] sm:$0xff]
    %v277 = vld [vmem:[#allocation2 + $0x238] sm:$0xff]
    %v278 = vld [vmem:[#allocation2 + $0x240] sm:$0xff]
    %v279 = vld [vmem:[#allocation2 + $0x248] sm:$0xff]
    %v280 = vld [vmem:[#allocation2 + $0x250] sm:$0xff]
    %v281 = vld [vmem:[#allocation2 + $0x258] sm:$0xff]
    %v282 = vld [vmem:[#allocation2 + $0x260] sm:$0xff]
    %v283 = vld [vmem:[#allocation2 + $0x268] sm:$0xff]
    %v284 = vld [vmem:[#allocation2 + $0x270] sm:$0xff]
    %v285 = vld [vmem:[#allocation2 + $0x278] sm:$0xff]
    %v286 = vld [vmem:[#allocation2 + $0x280] sm:$0xff]
    %v287 = vld [vmem:[#allocation2 + $0x288] sm:$0xff]
    %v288 = vld [vmem:[#allocation2 + $0x290] sm:$0xff]
    %v289 = vld [vmem:[#allocation2 + $0x298] sm:$0xff]
    %v290 = vld [vmem:[#allocation2 + $0x2a0] sm:$0xff]
    %v291 = vld [vmem:[#allocation2 + $0x2a8] sm:$0xff]
    %v292 = vld [vmem:[#allocation2 + $0x2b0] sm:$0xff]
    %v293 = vld [vmem:[#allocation2 + $0x2b8] sm:$0xff]
    %v294 = vld [vmem:[#allocation2 + $0x2c0] sm:$0xff]
    %v295 = vld [vmem:[#allocation2 + $0x2c8] sm:$0xff]
    %v296 = vld [vmem:[#allocation2 + $0x2d0] sm:$0xff]
    %v297 = vld [vmem:[#allocation2 + $0x2d8] sm:$0xff]
    %v298 = vld [vmem:[#allocation2 + $0x2e0] sm:$0xff]
    %v299 = vld [vmem:[#allocation2 + $0x2e8] sm:$0xff]
    %v300 = vld [vmem:[#allocation2 + $0x2f0] sm:$0xff]
    %v301 = vld [vmem:[#allocation2 + $0x2f8] sm:$0xff]
    %v302 = vld [vmem:[#allocation2 + $0x300] sm:$0xff]
    %v303 = vld [vmem:[#allocation2 + $0x308] sm:$0xff]
    %v304 = vld [vmem:[#allocation2 + $0x310] sm:$0xff]
    %v305 = vld [vmem:[#allocation2 + $0x318] sm:$0xff]
    %v306 = vld [vmem:[#allocation2 + $0x320] sm:$0xff]
    %v307 = vld [vmem:[#allocation2 + $0x328] sm:$0xff]
    %v308 = vld [vmem:[#allocation2 + $0x330] sm:$0xff]
    %v309 = vld [vmem:[#allocation2 + $0x338] sm:$0xff]
    %v310 = vld [vmem:[#allocation2 + $0x340] sm:$0xff]
    %v311 = vld [vmem:[#allocation2 + $0x348] sm:$0xff]
    %v312 = vld [vmem:[#allocation2 + $0x350] sm:$0xff]
    %v313 = vld [vmem:[#allocation2 + $0x358] sm:$0xff]
    %v314 = vld [vmem:[#allocation2 + $0x360] sm:$0xff]
    %v315 = vld [vmem:[#allocation2 + $0x368] sm:$0xff]
    %v316 = vld [vmem:[#allocation2 + $0x370] sm:$0xff]
    %v317 = vld [vmem:[#allocation2 + $0x378] sm:$0xff]
    %v318 = vld [vmem:[#allocation2 + $0x380] sm:$0xff]
    %v319 = vld [vmem:[#allocation2 + $0x388] sm:$0xff]
    %v320 = vld [vmem:[#allocation2 + $0x390] sm:$0xff]
    %v321 = vld [vmem:[#allocation2 + $0x398] sm:$0xff]
    %v322 = vld [vmem:[#allocation2 + $0x3a0] sm:$0xff]
    %v323 = vld [vmem:[#allocation2 + $0x3a8] sm:$0xff]
    %v324 = vld [vmem:[#allocation2 + $0x3b0] sm:$0xff]
    %v325 = vld [vmem:[#allocation2 + $0x3b8] sm:$0xff]
    %v326 = vld [vmem:[#allocation2 + $0x3c0] sm:$0xff]
    %v327 = vld [vmem:[#allocation2 + $0x3c8] sm:$0xff]
    %v328 = vld [vmem:[#allocation2 + $0x3d0] sm:$0xff]
    %v329 = vld [vmem:[#allocation2 + $0x3d8] sm:$0xff]
    %v330 = vld [vmem:[#allocation2 + $0x3e0] sm:$0xff]
    %v331 = vld [vmem:[#allocation2 + $0x3e8] sm:$0xff]
    %v332 = vld [vmem:[#allocation2 + $0x3f0] sm:$0xff]
    %v333 = vld [vmem:[#allocation2 + $0x3f8] sm:$0xff]
    %v334 = vld [vmem:[%s6] sm:$0xff]
    %v336 = vperm.slane %v334, 0
    %v337 = vperm.slane %v334, 1
    %v338 = vperm.slane %v334, 2
    %v339 = vperm.slane %v334, 3
    %v340 = vperm.slane %v334, 4
    %v341 = vperm.slane %v334, 5
    %v342 = vperm.slane %v334, 6
    %v343 = vperm.slane %v334, 7
    %v480 = vunpack.c.l.b16 %v206
    %v481 = vunpack.c.h.b16 %v206
    %v482 = vunpack.c.l.b16 %v207
    %v483 = vunpack.c.h.b16 %v207
    %v484 = vunpack.c.l.b16 %v208
    %v485 = vunpack.c.h.b16 %v208
    %v486 = vunpack.c.l.b16 %v209
    %v487 = vunpack.c.h.b16 %v209
    %v488 = vunpack.c.l.b16 %v210
    %v489 = vunpack.c.h.b16 %v210
    %v490 = vunpack.c.l.b16 %v211
    %v491 = vunpack.c.h.b16 %v211
    %v492 = vunpack.c.l.b16 %v212
    %v493 = vunpack.c.h.b16 %v212
    %v494 = vunpack.c.l.b16 %v213
    %v495 = vunpack.c.h.b16 %v213
    %v496 = vunpack.c.l.b16 %v214
    %v497 = vunpack.c.h.b16 %v214
    %v498 = vunpack.c.l.b16 %v215
    %v499 = vunpack.c.h.b16 %v215
    %v500 = vunpack.c.l.b16 %v216
    %v501 = vunpack.c.h.b16 %v216
    %v502 = vunpack.c.l.b16 %v217
    %v503 = vunpack.c.h.b16 %v217
    %v504 = vunpack.c.l.b16 %v218
    %v505 = vunpack.c.h.b16 %v218
    %v506 = vunpack.c.l.b16 %v219
    %v507 = vunpack.c.h.b16 %v219
    %v508 = vunpack.c.l.b16 %v220
    %v509 = vunpack.c.h.b16 %v220
    %v510 = vunpack.c.l.b16 %v221
    %v511 = vunpack.c.h.b16 %v221
    %v512 = vunpack.c.l.b16 %v222
    %v513 = vunpack.c.h.b16 %v222
    %v514 = vunpack.c.l.b16 %v223
    %v515 = vunpack.c.h.b16 %v223
    %v516 = vunpack.c.l.b16 %v224
    %v517 = vunpack.c.h.b16 %v224
    %v518 = vunpack.c.l.b16 %v225
    %v519 = vunpack.c.h.b16 %v225
    %v520 = vunpack.c.l.b16 %v226
    %v521 = vunpack.c.h.b16 %v226
    %v522 = vunpack.c.l.b16 %v227
    %v523 = vunpack.c.h.b16 %v227
    %v524 = vunpack.c.l.b16 %v228
    %v525 = vunpack.c.h.b16 %v228
    %v526 = vunpack.c.l.b16 %v229
    %v527 = vunpack.c.h.b16 %v229
    %v528 = vunpack.c.l.b16 %v230
    %v529 = vunpack.c.h.b16 %v230
    %v530 = vunpack.c.l.b16 %v231
    %v531 = vunpack.c.h.b16 %v231
    %v532 = vunpack.c.l.b16 %v232
    %v533 = vunpack.c.h.b16 %v232
    %v534 = vunpack.c.l.b16 %v233
    %v535 = vunpack.c.h.b16 %v233
    %v536 = vunpack.c.l.b16 %v234
    %v537 = vunpack.c.h.b16 %v234
    %v538 = vunpack.c.l.b16 %v235
    %v539 = vunpack.c.h.b16 %v235
    %v540 = vunpack.c.l.b16 %v236
    %v541 = vunpack.c.h.b16 %v236
    %v542 = vunpack.c.l.b16 %v237
    %v543 = vunpack.c.h.b16 %v237
    %v544 = vunpack.c.l.b16 %v238
    %v545 = vunpack.c.h.b16 %v238
    %v546 = vunpack.c.l.b16 %v239
    %v547 = vunpack.c.h.b16 %v239
    %v548 = vunpack.c.l.b16 %v240
    %v549 = vunpack.c.h.b16 %v240
    %v550 = vunpack.c.l.b16 %v241
    %v551 = vunpack.c.h.b16 %v241
    %v552 = vunpack.c.l.b16 %v242
    %v553 = vunpack.c.h.b16 %v242
    %v554 = vunpack.c.l.b16 %v243
    %v555 = vunpack.c.h.b16 %v243
    %v556 = vunpack.c.l.b16 %v244
    %v557 = vunpack.c.h.b16 %v244
    %v558 = vunpack.c.l.b16 %v245
    %v559 = vunpack.c.h.b16 %v245
    %v560 = vunpack.c.l.b16 %v246
    %v561 = vunpack.c.h.b16 %v246
    %v562 = vunpack.c.l.b16 %v247
    %v563 = vunpack.c.h.b16 %v247
    %v564 = vunpack.c.l.b16 %v248
    %v565 = vunpack.c.h.b16 %v248
    %v566 = vunpack.c.l.b16 %v249
    %v567 = vunpack.c.h.b16 %v249
    %v568 = vunpack.c.l.b16 %v250
    %v569 = vunpack.c.h.b16 %v250
    %v570 = vunpack.c.l.b16 %v251
    %v571 = vunpack.c.h.b16 %v251
    %v572 = vunpack.c.l.b16 %v252
    %v573 = vunpack.c.h.b16 %v252
    %v574 = vunpack.c.l.b16 %v253
    %v575 = vunpack.c.h.b16 %v253
    %v576 = vunpack.c.l.b16 %v254
    %v577 = vunpack.c.h.b16 %v254
    %v578 = vunpack.c.l.b16 %v255
    %v579 = vunpack.c.h.b16 %v255
    %v580 = vunpack.c.l.b16 %v256
    %v581 = vunpack.c.h.b16 %v256
    %v582 = vunpack.c.l.b16 %v257
    %v583 = vunpack.c.h.b16 %v257
    %v584 = vunpack.c.l.b16 %v258
    %v585 = vunpack.c.h.b16 %v258
    %v586 = vunpack.c.l.b16 %v259
    %v587 = vunpack.c.h.b16 %v259
    %v588 = vunpack.c.l.b16 %v260
    %v589 = vunpack.c.h.b16 %v260
    %v590 = vunpack.c.l.b16 %v261
    %v591 = vunpack.c.h.b16 %v261
    %v592 = vunpack.c.l.b16 %v262
    %v593 = vunpack.c.h.b16 %v262
    %v594 = vunpack.c.l.b16 %v263
    %v595 = vunpack.c.h.b16 %v263
    %v596 = vunpack.c.l.b16 %v264
    %v597 = vunpack.c.h.b16 %v264
    %v598 = vunpack.c.l.b16 %v265
    %v599 = vunpack.c.h.b16 %v265
    %v600 = vunpack.c.l.b16 %v266
    %v601 = vunpack.c.h.b16 %v266
    %v602 = vunpack.c.l.b16 %v267
    %v603 = vunpack.c.h.b16 %v267
    %v604 = vunpack.c.l.b16 %v268
    %v605 = vunpack.c.h.b16 %v268
    %v606 = vunpack.c.l.b16 %v269
    %v607 = vunpack.c.h.b16 %v269
    %v608 = vunpack.c.l.b16 %v270
    %v609 = vunpack.c.h.b16 %v270
    %v610 = vunpack.c.l.b16 %v271
    %v611 = vunpack.c.h.b16 %v271
    %v612 = vunpack.c.l.b16 %v272
    %v613 = vunpack.c.h.b16 %v272
    %v614 = vunpack.c.l.b16 %v273
    %v615 = vunpack.c.h.b16 %v273
    %v616 = vunpack.c.l.b16 %v274
    %v617 = vunpack.c.h.b16 %v274
    %v618 = vunpack.c.l.b16 %v275
    %v619 = vunpack.c.h.b16 %v275
    %v620 = vunpack.c.l.b16 %v276
    %v621 = vunpack.c.h.b16 %v276
    %v622 = vunpack.c.l.b16 %v277
    %v623 = vunpack.c.h.b16 %v277
    %v624 = vunpack.c.l.b16 %v278
    %v625 = vunpack.c.h.b16 %v278
    %v626 = vunpack.c.l.b16 %v279
    %v627 = vunpack.c.h.b16 %v279
    %v628 = vunpack.c.l.b16 %v280
    %v629 = vunpack.c.h.b16 %v280
    %v630 = vunpack.c.l.b16 %v281
    %v631 = vunpack.c.h.b16 %v281
    %v632 = vunpack.c.l.b16 %v282
    %v633 = vunpack.c.h.b16 %v282
    %v634 = vunpack.c.l.b16 %v283
    %v635 = vunpack.c.h.b16 %v283
    %v636 = vunpack.c.l.b16 %v284
    %v637 = vunpack.c.h.b16 %v284
    %v638 = vunpack.c.l.b16 %v285
    %v639 = vunpack.c.h.b16 %v285
    %v640 = vunpack.c.l.b16 %v286
    %v641 = vunpack.c.h.b16 %v286
    %v642 = vunpack.c.l.b16 %v287
    %v643 = vunpack.c.h.b16 %v287
    %v644 = vunpack.c.l.b16 %v288
    %v645 = vunpack.c.h.b16 %v288
    %v646 = vunpack.c.l.b16 %v289
    %v647 = vunpack.c.h.b16 %v289
    %v648 = vunpack.c.l.b16 %v290
    %v649 = vunpack.c.h.b16 %v290
    %v650 = vunpack.c.l.b16 %v291
    %v651 = vunpack.c.h.b16 %v291
    %v652 = vunpack.c.l.b16 %v292
    %v653 = vunpack.c.h.b16 %v292
    %v654 = vunpack.c.l.b16 %v293
    %v655 = vunpack.c.h.b16 %v293
    %v656 = vunpack.c.l.b16 %v294
    %v657 = vunpack.c.h.b16 %v294
    %v658 = vunpack.c.l.b16 %v295
    %v659 = vunpack.c.h.b16 %v295
    %v660 = vunpack.c.l.b16 %v296
    %v661 = vunpack.c.h.b16 %v296
    %v662 = vunpack.c.l.b16 %v297
    %v663 = vunpack.c.h.b16 %v297
    %v664 = vunpack.c.l.b16 %v298
    %v665 = vunpack.c.h.b16 %v298
    %v666 = vunpack.c.l.b16 %v299
    %v667 = vunpack.c.h.b16 %v299
    %v668 = vunpack.c.l.b16 %v300
    %v669 = vunpack.c.h.b16 %v300
    %v670 = vunpack.c.l.b16 %v301
    %v671 = vunpack.c.h.b16 %v301
    %v672 = vunpack.c.l.b16 %v302
    %v673 = vunpack.c.h.b16 %v302
    %v674 = vunpack.c.l.b16 %v303
    %v675 = vunpack.c.h.b16 %v303
    %v676 = vunpack.c.l.b16 %v304
    %v677 = vunpack.c.h.b16 %v304
    %v678 = vunpack.c.l.b16 %v305
    %v679 = vunpack.c.h.b16 %v305
    %v680 = vunpack.c.l.b16 %v306
    %v681 = vunpack.c.h.b16 %v306
    %v682 = vunpack.c.l.b16 %v307
    %v683 = vunpack.c.h.b16 %v307
    %v684 = vunpack.c.l.b16 %v308
    %v685 = vunpack.c.h.b16 %v308
    %v686 = vunpack.c.l.b16 %v309
    %v687 = vunpack.c.h.b16 %v309
    %v688 = vunpack.c.l.b16 %v310
    %v689 = vunpack.c.h.b16 %v310
    %v690 = vunpack.c.l.b16 %v311
    %v691 = vunpack.c.h.b16 %v311
    %v692 = vunpack.c.l.b16 %v312
    %v693 = vunpack.c.h.b16 %v312
    %v694 = vunpack.c.l.b16 %v313
    %v695 = vunpack.c.h.b16 %v313
    %v696 = vunpack.c.l.b16 %v314
    %v697 = vunpack.c.h.b16 %v314
    %v698 = vunpack.c.l.b16 %v315
    %v699 = vunpack.c.h.b16 %v315
    %v700 = vunpack.c.l.b16 %v316
    %v701 = vunpack.c.h.b16 %v316
    %v702 = vunpack.c.l.b16 %v317
    %v703 = vunpack.c.h.b16 %v317
    %v704 = vunpack.c.l.b16 %v318
    %v705 = vunpack.c.h.b16 %v318
    %v706 = vunpack.c.l.b16 %v319
    %v707 = vunpack.c.h.b16 %v319
    %v708 = vunpack.c.l.b16 %v320
    %v709 = vunpack.c.h.b16 %v320
    %v710 = vunpack.c.l.b16 %v321
    %v711 = vunpack.c.h.b16 %v321
    %v712 = vunpack.c.l.b16 %v322
    %v713 = vunpack.c.h.b16 %v322
    %v714 = vunpack.c.l.b16 %v323
    %v715 = vunpack.c.h.b16 %v323
    %v716 = vunpack.c.l.b16 %v324
    %v717 = vunpack.c.h.b16 %v324
    %v718 = vunpack.c.l.b16 %v325
    %v719 = vunpack.c.h.b16 %v325
    %v720 = vunpack.c.l.b16 %v326
    %v721 = vunpack.c.h.b16 %v326
    %v722 = vunpack.c.l.b16 %v327
    %v723 = vunpack.c.h.b16 %v327
    %v724 = vunpack.c.l.b16 %v328
    %v725 = vunpack.c.h.b16 %v328
    %v726 = vunpack.c.l.b16 %v329
    %v727 = vunpack.c.h.b16 %v329
    %v728 = vunpack.c.l.b16 %v330
    %v729 = vunpack.c.h.b16 %v330
    %v730 = vunpack.c.l.b16 %v331
    %v731 = vunpack.c.h.b16 %v331
    %v732 = vunpack.c.l.b16 %v332
    %v733 = vunpack.c.h.b16 %v332
    %v734 = vunpack.c.l.b16 %v333
    %v735 = vunpack.c.h.b16 %v333
    %v736 = vpack.c.b16 %v488, %v480
    %v737 = vpack.c.b16 %v489, %v481
    %v738 = vpack.c.b16 %v490, %v482
    %v739 = vpack.c.b16 %v491, %v483
    %v740 = vpack.c.b16 %v492, %v484
    %v741 = vpack.c.b16 %v493, %v485
    %v742 = vpack.c.b16 %v494, %v486
    %v743 = vpack.c.b16 %v495, %v487
    %v744 = vpack.c.b16 %v504, %v496
    %v745 = vpack.c.b16 %v505, %v497
    %v746 = vpack.c.b16 %v506, %v498
    %v747 = vpack.c.b16 %v507, %v499
    %v748 = vpack.c.b16 %v508, %v500
    %v749 = vpack.c.b16 %v509, %v501
    %v750 = vpack.c.b16 %v510, %v502
    %v751 = vpack.c.b16 %v511, %v503
    %v752 = vpack.c.b16 %v520, %v512
    %v753 = vpack.c.b16 %v521, %v513
    %v754 = vpack.c.b16 %v522, %v514
    %v755 = vpack.c.b16 %v523, %v515
    %v756 = vpack.c.b16 %v524, %v516
    %v757 = vpack.c.b16 %v525, %v517
    %v758 = vpack.c.b16 %v526, %v518
    %v759 = vpack.c.b16 %v527, %v519
    %v760 = vpack.c.b16 %v536, %v528
    %v761 = vpack.c.b16 %v537, %v529
    %v762 = vpack.c.b16 %v538, %v530
    %v763 = vpack.c.b16 %v539, %v531
    %v764 = vpack.c.b16 %v540, %v532
    %v765 = vpack.c.b16 %v541, %v533
    %v766 = vpack.c.b16 %v542, %v534
    %v767 = vpack.c.b16 %v543, %v535
    %v768 = vpack.c.b16 %v552, %v544
    %v769 = vpack.c.b16 %v553, %v545
    %v770 = vpack.c.b16 %v554, %v546
    %v771 = vpack.c.b16 %v555, %v547
    %v772 = vpack.c.b16 %v556, %v548
    %v773 = vpack.c.b16 %v557, %v549
    %v774 = vpack.c.b16 %v558, %v550
    %v775 = vpack.c.b16 %v559, %v551
    %v776 = vpack.c.b16 %v568, %v560
    %v777 = vpack.c.b16 %v569, %v561
    %v778 = vpack.c.b16 %v570, %v562
    %v779 = vpack.c.b16 %v571, %v563
    %v780 = vpack.c.b16 %v572, %v564
    %v781 = vpack.c.b16 %v573, %v565
    %v782 = vpack.c.b16 %v574, %v566
    %v783 = vpack.c.b16 %v575, %v567
    %v784 = vpack.c.b16 %v584, %v576
    %v785 = vpack.c.b16 %v585, %v577
    %v786 = vpack.c.b16 %v586, %v578
    %v787 = vpack.c.b16 %v587, %v579
    %v788 = vpack.c.b16 %v588, %v580
    %v789 = vpack.c.b16 %v589, %v581
    %v790 = vpack.c.b16 %v590, %v582
    %v791 = vpack.c.b16 %v591, %v583
    %v792 = vpack.c.b16 %v600, %v592
    %v793 = vpack.c.b16 %v601, %v593
    %v794 = vpack.c.b16 %v602, %v594
    %v795 = vpack.c.b16 %v603, %v595
    %v796 = vpack.c.b16 %v604, %v596
    %v797 = vpack.c.b16 %v605, %v597
    %v798 = vpack.c.b16 %v606, %v598
    %v799 = vpack.c.b16 %v607, %v599
    %v800 = vpack.c.b16 %v616, %v608
    %v801 = vpack.c.b16 %v617, %v609
    %v802 = vpack.c.b16 %v618, %v610
    %v803 = vpack.c.b16 %v619, %v611
    %v804 = vpack.c.b16 %v620, %v612
    %v805 = vpack.c.b16 %v621, %v613
    %v806 = vpack.c.b16 %v622, %v614
    %v807 = vpack.c.b16 %v623, %v615
    %v808 = vpack.c.b16 %v632, %v624
    %v809 = vpack.c.b16 %v633, %v625
    %v810 = vpack.c.b16 %v634, %v626
    %v811 = vpack.c.b16 %v635, %v627
    %v812 = vpack.c.b16 %v636, %v628
    %v813 = vpack.c.b16 %v637, %v629
    %v814 = vpack.c.b16 %v638, %v630
    %v815 = vpack.c.b16 %v639, %v631
    %v816 = vpack.c.b16 %v648, %v640
    %v817 = vpack.c.b16 %v649, %v641
    %v818 = vpack.c.b16 %v650, %v642
    %v819 = vpack.c.b16 %v651, %v643
    %v820 = vpack.c.b16 %v652, %v644
    %v821 = vpack.c.b16 %v653, %v645
    %v822 = vpack.c.b16 %v654, %v646
    %v823 = vpack.c.b16 %v655, %v647
    %v824 = vpack.c.b16 %v664, %v656
    %v825 = vpack.c.b16 %v665, %v657
    %v826 = vpack.c.b16 %v666, %v658
    %v827 = vpack.c.b16 %v667, %v659
    %v828 = vpack.c.b16 %v668, %v660
    %v829 = vpack.c.b16 %v669, %v661
    %v830 = vpack.c.b16 %v670, %v662
    %v831 = vpack.c.b16 %v671, %v663
    %v832 = vpack.c.b16 %v680, %v672
    %v833 = vpack.c.b16 %v681, %v673
    %v834 = vpack.c.b16 %v682, %v674
    %v835 = vpack.c.b16 %v683, %v675
    %v836 = vpack.c.b16 %v684, %v676
    %v837 = vpack.c.b16 %v685, %v677
    %v838 = vpack.c.b16 %v686, %v678
    %v839 = vpack.c.b16 %v687, %v679
    %v840 = vpack.c.b16 %v696, %v688
    %v841 = vpack.c.b16 %v697, %v689
    %v842 = vpack.c.b16 %v698, %v690
    %v843 = vpack.c.b16 %v699, %v691
    %v844 = vpack.c.b16 %v700, %v692
    %v845 = vpack.c.b16 %v701, %v693
    %v846 = vpack.c.b16 %v702, %v694
    %v847 = vpack.c.b16 %v703, %v695
    %v848 = vpack.c.b16 %v712, %v704
    %v849 = vpack.c.b16 %v713, %v705
    %v850 = vpack.c.b16 %v714, %v706
    %v851 = vpack.c.b16 %v715, %v707
    %v852 = vpack.c.b16 %v716, %v708
    %v853 = vpack.c.b16 %v717, %v709
    %v854 = vpack.c.b16 %v718, %v710
    %v855 = vpack.c.b16 %v719, %v711
    %v856 = vpack.c.b16 %v728, %v720
    %v857 = vpack.c.b16 %v729, %v721
    %v858 = vpack.c.b16 %v730, %v722
    %v859 = vpack.c.b16 %v731, %v723
    %v860 = vpack.c.b16 %v732, %v724
    %v861 = vpack.c.b16 %v733, %v725
    %v862 = vpack.c.b16 %v734, %v726
    %v863 = vpack.c.b16 %v735, %v727
    %992 = vmatpush.bf16.msra.mxu0 %v792
    %993 = vmatpush.bf16.msra.mxu0 %v784
    %994 = vmatpush.bf16.msra.mxu0 %v776
    %995 = vmatpush.bf16.msra.mxu0 %v768
    %996 = vmatpush.bf16.msra.mxu0 %v760
    %997 = vmatpush.bf16.msra.mxu0 %v752
    %998 = vmatpush.bf16.msra.mxu0 %v744
    %999 = vmatpush.bf16.msra.mxu0 %v736
    %1000 = vmatmul.bf16.gmra.mxu0 %v204
    %v1001 = vpop.f32.mrf.mxu0
    %v1002 = vadd.f32 %v336, %v1001
    %v1003 = vpop.f32.mrf.mxu0
    %v1004 = vadd.f32 %v336, %v1003
    %1005 = vdwg.mxu0
    %1006 = vmatpush.bf16.msra.mxu0 %v856
    %1007 = vmatpush.bf16.msra.mxu0 %v848
    %1008 = vmatpush.bf16.msra.mxu0 %v840
    %1009 = vmatpush.bf16.msra.mxu0 %v832
    %1010 = vmatpush.bf16.msra.mxu0 %v824
    %1011 = vmatpush.bf16.msra.mxu0 %v816
    %1012 = vmatpush.bf16.msra.mxu0 %v808
    %1013 = vmatpush.bf16.msra.mxu0 %v800
    %1014 = vmatmul.bf16.gmra.mxu0 %v205
    %v1015 = vpop.f32.mrf.mxu0
    %v1016 = vadd.f32 %v1002, %v1015
    %v1017 = vpop.f32.mrf.mxu0
    %v1018 = vadd.f32 %v1004, %v1017
    %1019 = vdwg.mxu0
    %1020 = vmatpush.bf16.msra.mxu0 %v793
    %1021 = vmatpush.bf16.msra.mxu0 %v785
    %1022 = vmatpush.bf16.msra.mxu0 %v777
    %1023 = vmatpush.bf16.msra.mxu0 %v769
    %1024 = vmatpush.bf16.msra.mxu0 %v761
    %1025 = vmatpush.bf16.msra.mxu0 %v753
    %1026 = vmatpush.bf16.msra.mxu0 %v745
    %1027 = vmatpush.bf16.msra.mxu0 %v737
    %1028 = vmatmul.bf16.gmra.mxu0 %v204
    %v1029 = vpop.f32.mrf.mxu0
    %v1030 = vadd.f32 %v337, %v1029
    %v1031 = vpop.f32.mrf.mxu0
    %v1032 = vadd.f32 %v337, %v1031
    %1033 = vdwg.mxu0
    %1034 = vmatpush.bf16.msra.mxu0 %v857
    %1035 = vmatpush.bf16.msra.mxu0 %v849
    %1036 = vmatpush.bf16.msra.mxu0 %v841
    %1037 = vmatpush.bf16.msra.mxu0 %v833
    %1038 = vmatpush.bf16.msra.mxu0 %v825
    %1039 = vmatpush.bf16.msra.mxu0 %v817
    %1040 = vmatpush.bf16.msra.mxu0 %v809
    %1041 = vmatpush.bf16.msra.mxu0 %v801
    %1042 = vmatmul.bf16.gmra.mxu0 %v205
    %v1043 = vpop.f32.mrf.mxu0
    %v1044 = vadd.f32 %v1030, %v1043
    %v1045 = vpop.f32.mrf.mxu0
    %v1046 = vadd.f32 %v1032, %v1045
    %1047 = vdwg.mxu0
    %1048 = vmatpush.bf16.msra.mxu0 %v794
    %1049 = vmatpush.bf16.msra.mxu0 %v786
    %1050 = vmatpush.bf16.msra.mxu0 %v778
    %1051 = vmatpush.bf16.msra.mxu0 %v770
    %1052 = vmatpush.bf16.msra.mxu0 %v762
    %1053 = vmatpush.bf16.msra.mxu0 %v754
    %1054 = vmatpush.bf16.msra.mxu0 %v746
    %1055 = vmatpush.bf16.msra.mxu0 %v738
    %1056 = vmatmul.bf16.gmra.mxu0 %v204
    %v1057 = vpop.f32.mrf.mxu0
    %v1058 = vadd.f32 %v338, %v1057
    %v1059 = vpop.f32.mrf.mxu0
    %v1060 = vadd.f32 %v338, %v1059
    %1061 = vdwg.mxu0
    %1062 = vmatpush.bf16.msra.mxu0 %v858
    %1063 = vmatpush.bf16.msra.mxu0 %v850
    %1064 = vmatpush.bf16.msra.mxu0 %v842
    %1065 = vmatpush.bf16.msra.mxu0 %v834
    %1066 = vmatpush.bf16.msra.mxu0 %v826
    %1067 = vmatpush.bf16.msra.mxu0 %v818
    %1068 = vmatpush.bf16.msra.mxu0 %v810
    %1069 = vmatpush.bf16.msra.mxu0 %v802
    %1070 = vmatmul.bf16.gmra.mxu0 %v205
    %v1071 = vpop.f32.mrf.mxu0
    %v1072 = vadd.f32 %v1058, %v1071
    %v1073 = vpop.f32.mrf.mxu0
    %v1074 = vadd.f32 %v1060, %v1073
    %1075 = vdwg.mxu0
    %1076 = vmatpush.bf16.msra.mxu0 %v795
    %1077 = vmatpush.bf16.msra.mxu0 %v787
    %1078 = vmatpush.bf16.msra.mxu0 %v779
    %1079 = vmatpush.bf16.msra.mxu0 %v771
    %1080 = vmatpush.bf16.msra.mxu0 %v763
    %1081 = vmatpush.bf16.msra.mxu0 %v755
    %1082 = vmatpush.bf16.msra.mxu0 %v747
    %1083 = vmatpush.bf16.msra.mxu0 %v739
    %1084 = vmatmul.bf16.gmra.mxu0 %v204
    %v1085 = vpop.f32.mrf.mxu0
    %v1086 = vadd.f32 %v339, %v1085
    %v1087 = vpop.f32.mrf.mxu0
    %v1088 = vadd.f32 %v339, %v1087
    %1089 = vdwg.mxu0
    %1090 = vmatpush.bf16.msra.mxu0 %v859
    %1091 = vmatpush.bf16.msra.mxu0 %v851
    %1092 = vmatpush.bf16.msra.mxu0 %v843
    %1093 = vmatpush.bf16.msra.mxu0 %v835
    %1094 = vmatpush.bf16.msra.mxu0 %v827
    %1095 = vmatpush.bf16.msra.mxu0 %v819
    %1096 = vmatpush.bf16.msra.mxu0 %v811
    %1097 = vmatpush.bf16.msra.mxu0 %v803
    %1098 = vmatmul.bf16.gmra.mxu0 %v205
    %v1099 = vpop.f32.mrf.mxu0
    %v1100 = vadd.f32 %v1086, %v1099
    %v1101 = vpop.f32.mrf.mxu0
    %v1102 = vadd.f32 %v1088, %v1101
    %1103 = vdwg.mxu0
    %1104 = vmatpush.bf16.msra.mxu0 %v796
    %1105 = vmatpush.bf16.msra.mxu0 %v788
    %1106 = vmatpush.bf16.msra.mxu0 %v780
    %1107 = vmatpush.bf16.msra.mxu0 %v772
    %1108 = vmatpush.bf16.msra.mxu0 %v764
    %1109 = vmatpush.bf16.msra.mxu0 %v756
    %1110 = vmatpush.bf16.msra.mxu0 %v748
    %1111 = vmatpush.bf16.msra.mxu0 %v740
    %1112 = vmatmul.bf16.gmra.mxu0 %v204
    %v1113 = vpop.f32.mrf.mxu0
    %v1114 = vadd.f32 %v340, %v1113
    %v1115 = vpop.f32.mrf.mxu0
    %v1116 = vadd.f32 %v340, %v1115
    %1117 = vdwg.mxu0
    %1118 = vmatpush.bf16.msra.mxu0 %v860
    %1119 = vmatpush.bf16.msra.mxu0 %v852
    %1120 = vmatpush.bf16.msra.mxu0 %v844
    %1121 = vmatpush.bf16.msra.mxu0 %v836
    %1122 = vmatpush.bf16.msra.mxu0 %v828
    %1123 = vmatpush.bf16.msra.mxu0 %v820
    %1124 = vmatpush.bf16.msra.mxu0 %v812
    %1125 = vmatpush.bf16.msra.mxu0 %v804
    %1126 = vmatmul.bf16.gmra.mxu0 %v205
    %v1127 = vpop.f32.mrf.mxu0
    %v1128 = vadd.f32 %v1114, %v1127
    %v1129 = vpop.f32.mrf.mxu0
    %v1130 = vadd.f32 %v1116, %v1129
    %1131 = vdwg.mxu0
    %1132 = vmatpush.bf16.msra.mxu0 %v797
    %1133 = vmatpush.bf16.msra.mxu0 %v789
    %1134 = vmatpush.bf16.msra.mxu0 %v781
    %1135 = vmatpush.bf16.msra.mxu0 %v773
    %1136 = vmatpush.bf16.msra.mxu0 %v765
    %1137 = vmatpush.bf16.msra.mxu0 %v757
    %1138 = vmatpush.bf16.msra.mxu0 %v749
    %1139 = vmatpush.bf16.msra.mxu0 %v741
    %1140 = vmatmul.bf16.gmra.mxu0 %v204
    %v1141 = vpop.f32.mrf.mxu0
    %v1142 = vadd.f32 %v341, %v1141
    %v1143 = vpop.f32.mrf.mxu0
    %v1144 = vadd.f32 %v341, %v1143
    %1145 = vdwg.mxu0
    %1146 = vmatpush.bf16.msra.mxu0 %v861
    %1147 = vmatpush.bf16.msra.mxu0 %v853
    %1148 = vmatpush.bf16.msra.mxu0 %v845
    %1149 = vmatpush.bf16.msra.mxu0 %v837
    %1150 = vmatpush.bf16.msra.mxu0 %v829
    %1151 = vmatpush.bf16.msra.mxu0 %v821
    %1152 = vmatpush.bf16.msra.mxu0 %v813
    %1153 = vmatpush.bf16.msra.mxu0 %v805
    %1154 = vmatmul.bf16.gmra.mxu0 %v205
    %v1155 = vpop.f32.mrf.mxu0
    %v1156 = vadd.f32 %v1142, %v1155
    %v1157 = vpop.f32.mrf.mxu0
    %v1158 = vadd.f32 %v1144, %v1157
    %1159 = vdwg.mxu0
    %1160 = vmatpush.bf16.msra.mxu0 %v798
    %1161 = vmatpush.bf16.msra.mxu0 %v790
    %1162 = vmatpush.bf16.msra.mxu0 %v782
    %1163 = vmatpush.bf16.msra.mxu0 %v774
    %1164 = vmatpush.bf16.msra.mxu0 %v766
    %1165 = vmatpush.bf16.msra.mxu0 %v758
    %1166 = vmatpush.bf16.msra.mxu0 %v750
    %1167 = vmatpush.bf16.msra.mxu0 %v742
    %1168 = vmatmul.bf16.gmra.mxu0 %v204
    %v1169 = vpop.f32.mrf.mxu0
    %v1170 = vadd.f32 %v342, %v1169
    %v1171 = vpop.f32.mrf.mxu0
    %v1172 = vadd.f32 %v342, %v1171
    %1173 = vdwg.mxu0
    %1174 = vmatpush.bf16.msra.mxu0 %v862
    %1175 = vmatpush.bf16.msra.mxu0 %v854
    %1176 = vmatpush.bf16.msra.mxu0 %v846
    %1177 = vmatpush.bf16.msra.mxu0 %v838
    %1178 = vmatpush.bf16.msra.mxu0 %v830
    %1179 = vmatpush.bf16.msra.mxu0 %v822
    %1180 = vmatpush.bf16.msra.mxu0 %v814
    %1181 = vmatpush.bf16.msra.mxu0 %v806
    %1182 = vmatmul.bf16.gmra.mxu0 %v205
    %v1183 = vpop.f32.mrf.mxu0
    %v1184 = vadd.f32 %v1170, %v1183
    %v1185 = vpop.f32.mrf.mxu0
    %v1186 = vadd.f32 %v1172, %v1185
    %1187 = vdwg.mxu0
    %1188 = vmatpush.bf16.msra.mxu0 %v799
    %1189 = vmatpush.bf16.msra.mxu0 %v791
    %1190 = vmatpush.bf16.msra.mxu0 %v783
    %1191 = vmatpush.bf16.msra.mxu0 %v775
    %1192 = vmatpush.bf16.msra.mxu0 %v767
    %1193 = vmatpush.bf16.msra.mxu0 %v759
    %1194 = vmatpush.bf16.msra.mxu0 %v751
    %1195 = vmatpush.bf16.msra.mxu0 %v743
    %1196 = vmatmul.bf16.gmra.mxu0 %v204
    %v1197 = vpop.f32.mrf.mxu0
    %v1198 = vadd.f32 %v343, %v1197
    %v1199 = vpop.f32.mrf.mxu0
    %v1200 = vadd.f32 %v343, %v1199
    %1201 = vdwg.mxu0
    %1202 = vmatpush.bf16.msra.mxu0 %v863
    %1203 = vmatpush.bf16.msra.mxu0 %v855
    %1204 = vmatpush.bf16.msra.mxu0 %v847
    %1205 = vmatpush.bf16.msra.mxu0 %v839
    %1206 = vmatpush.bf16.msra.mxu0 %v831
    %1207 = vmatpush.bf16.msra.mxu0 %v823
    %1208 = vmatpush.bf16.msra.mxu0 %v815
    %1209 = vmatpush.bf16.msra.mxu0 %v807
    %1210 = vmatmul.bf16.gmra.mxu0 %v205
    %v1211 = vpop.f32.mrf.mxu0
    %v1212 = vadd.f32 %v1198, %v1211
    %v1213 = vpop.f32.mrf.mxu0
    %v1214 = vadd.f32 %v1200, %v1213
    %1215 = vdwg.mxu0
    %v1216 = vmax.f32 %v1016, 0.0
    %v1217 = vmax.f32 %v1044, 0.0
    %v1218 = vmax.f32 %v1072, 0.0
    %v1219 = vmax.f32 %v1100, 0.0
    %v1220 = vmax.f32 %v1128, 0.0
    %v1221 = vmax.f32 %v1156, 0.0
    %v1222 = vmax.f32 %v1184, 0.0
    %v1223 = vmax.f32 %v1212, 0.0
    %v1224 = vmax.f32 %v1018, 0.0
    %v1225 = vmax.f32 %v1046, 0.0
    %v1226 = vmax.f32 %v1074, 0.0
    %v1227 = vmax.f32 %v1102, 0.0
    %v1228 = vmax.f32 %v1130, 0.0
    %v1229 = vmax.f32 %v1158, 0.0
    %v1230 = vmax.f32 %v1186, 0.0
    %v1231 = vmax.f32 %v1214, 0.0
    %v1232 = vpack.c.bf16 %v1224, %v1216
    %v1233 = vpack.c.bf16 %v1225, %v1217
    %v1234 = vpack.c.bf16 %v1226, %v1218
    %v1235 = vpack.c.bf16 %v1227, %v1219
    %v1236 = vpack.c.bf16 %v1228, %v1220
    %v1237 = vpack.c.bf16 %v1229, %v1221
    %v1238 = vpack.c.bf16 %v1230, %v1222
    %v1239 = vpack.c.bf16 %v1231, %v1223
    %v1240 = vld [vmem:[#allocation5] sm:$0xff]
    %v1241 = vld [vmem:[#allocation5 + $0x8] sm:$0xff]
    %v1242 = vld [vmem:[#allocation5 + $0x10] sm:$0xff]
    %v1243 = vld [vmem:[#allocation5 + $0x18] sm:$0xff]
    %v1244 = vld [vmem:[#allocation5 + $0x20] sm:$0xff]
    %v1245 = vld [vmem:[#allocation5 + $0x28] sm:$0xff]
    %v1246 = vld [vmem:[#allocation5 + $0x30] sm:$0xff]
    %v1247 = vld [vmem:[#allocation5 + $0x38] sm:$0xff]
    %v1248 = vld [vmem:[#allocation5 + $0x40] sm:$0xff]
    %v1249 = vld [vmem:[#allocation5 + $0x48] sm:$0xff]
    %v1250 = vld [vmem:[#allocation5 + $0x50] sm:$0xff]
    %v1251 = vld [vmem:[#allocation5 + $0x58] sm:$0xff]
    %v1252 = vld [vmem:[#allocation5 + $0x60] sm:$0xff]
    %v1253 = vld [vmem:[#allocation5 + $0x68] sm:$0xff]
    %v1254 = vld [vmem:[#allocation5 + $0x70] sm:$0xff]
    %v1255 = vld [vmem:[#allocation5 + $0x78] sm:$0xff]
    %v1256 = vld [vmem:[#allocation5 + $0x80] sm:$0xff]
    %v1257 = vld [vmem:[#allocation5 + $0x88] sm:$0xff]
    %v1258 = vld [vmem:[#allocation5 + $0x90] sm:$0xff]
    %v1259 = vld [vmem:[#allocation5 + $0x98] sm:$0xff]
    %v1260 = vld [vmem:[#allocation5 + $0xa0] sm:$0xff]
    %v1261 = vld [vmem:[#allocation5 + $0xa8] sm:$0xff]
    %v1262 = vld [vmem:[#allocation5 + $0xb0] sm:$0xff]
    %v1263 = vld [vmem:[#allocation5 + $0xb8] sm:$0xff]
    %v1264 = vld [vmem:[#allocation5 + $0xc0] sm:$0xff]
    %v1265 = vld [vmem:[#allocation5 + $0xc8] sm:$0xff]
    %v1266 = vld [vmem:[#allocation5 + $0xd0] sm:$0xff]
    %v1267 = vld [vmem:[#allocation5 + $0xd8] sm:$0xff]
    %v1268 = vld [vmem:[#allocation5 + $0xe0] sm:$0xff]
    %v1269 = vld [vmem:[#allocation5 + $0xe8] sm:$0xff]
    %v1270 = vld [vmem:[#allocation5 + $0xf0] sm:$0xff]
    %v1271 = vld [vmem:[#allocation5 + $0xf8] sm:$0xff]
    %v1272 = vld [vmem:[#allocation5 + $0x100] sm:$0xff]
    %v1273 = vld [vmem:[#allocation5 + $0x108] sm:$0xff]
    %v1274 = vld [vmem:[#allocation5 + $0x110] sm:$0xff]
    %v1275 = vld [vmem:[#allocation5 + $0x118] sm:$0xff]
    %v1276 = vld [vmem:[#allocation5 + $0x120] sm:$0xff]
    %v1277 = vld [vmem:[#allocation5 + $0x128] sm:$0xff]
    %v1278 = vld [vmem:[#allocation5 + $0x130] sm:$0xff]
    %v1279 = vld [vmem:[#allocation5 + $0x138] sm:$0xff]
    %v1280 = vld [vmem:[#allocation5 + $0x140] sm:$0xff]
    %v1281 = vld [vmem:[#allocation5 + $0x148] sm:$0xff]
    %v1282 = vld [vmem:[#allocation5 + $0x150] sm:$0xff]
    %v1283 = vld [vmem:[#allocation5 + $0x158] sm:$0xff]
    %v1284 = vld [vmem:[#allocation5 + $0x160] sm:$0xff]
    %v1285 = vld [vmem:[#allocation5 + $0x168] sm:$0xff]
    %v1286 = vld [vmem:[#allocation5 + $0x170] sm:$0xff]
    %v1287 = vld [vmem:[#allocation5 + $0x178] sm:$0xff]
    %v1288 = vld [vmem:[#allocation5 + $0x180] sm:$0xff]
    %v1289 = vld [vmem:[#allocation5 + $0x188] sm:$0xff]
    %v1290 = vld [vmem:[#allocation5 + $0x190] sm:$0xff]
    %v1291 = vld [vmem:[#allocation5 + $0x198] sm:$0xff]
    %v1292 = vld [vmem:[#allocation5 + $0x1a0] sm:$0xff]
    %v1293 = vld [vmem:[#allocation5 + $0x1a8] sm:$0xff]
    %v1294 = vld [vmem:[#allocation5 + $0x1b0] sm:$0xff]
    %v1295 = vld [vmem:[#allocation5 + $0x1b8] sm:$0xff]
    %v1296 = vld [vmem:[#allocation5 + $0x1c0] sm:$0xff]
    %v1297 = vld [vmem:[#allocation5 + $0x1c8] sm:$0xff]
    %v1298 = vld [vmem:[#allocation5 + $0x1d0] sm:$0xff]
    %v1299 = vld [vmem:[#allocation5 + $0x1d8] sm:$0xff]
    %v1300 = vld [vmem:[#allocation5 + $0x1e0] sm:$0xff]
    %v1301 = vld [vmem:[#allocation5 + $0x1e8] sm:$0xff]
    %v1302 = vld [vmem:[#allocation5 + $0x1f0] sm:$0xff]
    %v1303 = vld [vmem:[#allocation5 + $0x1f8] sm:$0xff]
    %v1304 = vld [vmem:[#allocation5 + $0x200] sm:$0xff]
    %v1305 = vld [vmem:[#allocation5 + $0x208] sm:$0xff]
    %v1306 = vld [vmem:[#allocation5 + $0x210] sm:$0xff]
    %v1307 = vld [vmem:[#allocation5 + $0x218] sm:$0xff]
    %v1308 = vld [vmem:[#allocation5 + $0x220] sm:$0xff]
    %v1309 = vld [vmem:[#allocation5 + $0x228] sm:$0xff]
    %v1310 = vld [vmem:[#allocation5 + $0x230] sm:$0xff]
    %v1311 = vld [vmem:[#allocation5 + $0x238] sm:$0xff]
    %v1312 = vld [vmem:[#allocation5 + $0x240] sm:$0xff]
    %v1313 = vld [vmem:[#allocation5 + $0x248] sm:$0xff]
    %v1314 = vld [vmem:[#allocation5 + $0x250] sm:$0xff]
    %v1315 = vld [vmem:[#allocation5 + $0x258] sm:$0xff]
    %v1316 = vld [vmem:[#allocation5 + $0x260] sm:$0xff]
    %v1317 = vld [vmem:[#allocation5 + $0x268] sm:$0xff]
    %v1318 = vld [vmem:[#allocation5 + $0x270] sm:$0xff]
    %v1319 = vld [vmem:[#allocation5 + $0x278] sm:$0xff]
    %v1320 = vld [vmem:[#allocation5 + $0x280] sm:$0xff]
    %v1321 = vld [vmem:[#allocation5 + $0x288] sm:$0xff]
    %v1322 = vld [vmem:[#allocation5 + $0x290] sm:$0xff]
    %v1323 = vld [vmem:[#allocation5 + $0x298] sm:$0xff]
    %v1324 = vld [vmem:[#allocation5 + $0x2a0] sm:$0xff]
    %v1325 = vld [vmem:[#allocation5 + $0x2a8] sm:$0xff]
    %v1326 = vld [vmem:[#allocation5 + $0x2b0] sm:$0xff]
    %v1327 = vld [vmem:[#allocation5 + $0x2b8] sm:$0xff]
    %v1328 = vld [vmem:[#allocation5 + $0x2c0] sm:$0xff]
    %v1329 = vld [vmem:[#allocation5 + $0x2c8] sm:$0xff]
    %v1330 = vld [vmem:[#allocation5 + $0x2d0] sm:$0xff]
    %v1331 = vld [vmem:[#allocation5 + $0x2d8] sm:$0xff]
    %v1332 = vld [vmem:[#allocation5 + $0x2e0] sm:$0xff]
    %v1333 = vld [vmem:[#allocation5 + $0x2e8] sm:$0xff]
    %v1334 = vld [vmem:[#allocation5 + $0x2f0] sm:$0xff]
    %v1335 = vld [vmem:[#allocation5 + $0x2f8] sm:$0xff]
    %v1336 = vld [vmem:[#allocation5 + $0x300] sm:$0xff]
    %v1337 = vld [vmem:[#allocation5 + $0x308] sm:$0xff]
    %v1338 = vld [vmem:[#allocation5 + $0x310] sm:$0xff]
    %v1339 = vld [vmem:[#allocation5 + $0x318] sm:$0xff]
    %v1340 = vld [vmem:[#allocation5 + $0x320] sm:$0xff]
    %v1341 = vld [vmem:[#allocation5 + $0x328] sm:$0xff]
    %v1342 = vld [vmem:[#allocation5 + $0x330] sm:$0xff]
    %v1343 = vld [vmem:[#allocation5 + $0x338] sm:$0xff]
    %v1344 = vld [vmem:[#allocation5 + $0x340] sm:$0xff]
    %v1345 = vld [vmem:[#allocation5 + $0x348] sm:$0xff]
    %v1346 = vld [vmem:[#allocation5 + $0x350] sm:$0xff]
    %v1347 = vld [vmem:[#allocation5 + $0x358] sm:$0xff]
    %v1348 = vld [vmem:[#allocation5 + $0x360] sm:$0xff]
    %v1349 = vld [vmem:[#allocation5 + $0x368] sm:$0xff]
    %v1350 = vld [vmem:[#allocation5 + $0x370] sm:$0xff]
    %v1351 = vld [vmem:[#allocation5 + $0x378] sm:$0xff]
    %v1352 = vld [vmem:[#allocation5 + $0x380] sm:$0xff]
    %v1353 = vld [vmem:[#allocation5 + $0x388] sm:$0xff]
    %v1354 = vld [vmem:[#allocation5 + $0x390] sm:$0xff]
    %v1355 = vld [vmem:[#allocation5 + $0x398] sm:$0xff]
    %v1356 = vld [vmem:[#allocation5 + $0x3a0] sm:$0xff]
    %v1357 = vld [vmem:[#allocation5 + $0x3a8] sm:$0xff]
    %v1358 = vld [vmem:[#allocation5 + $0x3b0] sm:$0xff]
    %v1359 = vld [vmem:[#allocation5 + $0x3b8] sm:$0xff]
    %v1360 = vld [vmem:[#allocation5 + $0x3c0] sm:$0xff]
    %v1361 = vld [vmem:[#allocation5 + $0x3c8] sm:$0xff]
    %v1362 = vld [vmem:[#allocation5 + $0x3d0] sm:$0xff]
    %v1363 = vld [vmem:[#allocation5 + $0x3d8] sm:$0xff]
    %v1364 = vld [vmem:[#allocation5 + $0x3e0] sm:$0xff]
    %v1365 = vld [vmem:[#allocation5 + $0x3e8] sm:$0xff]
    %v1366 = vld [vmem:[#allocation5 + $0x3f0] sm:$0xff]
    %v1367 = vld [vmem:[#allocation5 + $0x3f8] sm:$0xff]
    %v1368 = vld [vmem:[%s8] sm:$0x3]
    %v1370 = vperm.slane %v1368, 0
    %v1371 = vperm.slane %v1368, 1
    %v1502 = vunpack.c.l.b16 %v1240
    %v1503 = vunpack.c.h.b16 %v1240
    %v1504 = vunpack.c.l.b16 %v1241
    %v1505 = vunpack.c.h.b16 %v1241
    %v1506 = vunpack.c.l.b16 %v1242
    %v1507 = vunpack.c.h.b16 %v1242
    %v1508 = vunpack.c.l.b16 %v1243
    %v1509 = vunpack.c.h.b16 %v1243
    %v1510 = vunpack.c.l.b16 %v1244
    %v1511 = vunpack.c.h.b16 %v1244
    %v1512 = vunpack.c.l.b16 %v1245
    %v1513 = vunpack.c.h.b16 %v1245
    %v1514 = vunpack.c.l.b16 %v1246
    %v1515 = vunpack.c.h.b16 %v1246
    %v1516 = vunpack.c.l.b16 %v1247
    %v1517 = vunpack.c.h.b16 %v1247
    %v1518 = vunpack.c.l.b16 %v1248
    %v1519 = vunpack.c.h.b16 %v1248
    %v1520 = vunpack.c.l.b16 %v1249
    %v1521 = vunpack.c.h.b16 %v1249
    %v1522 = vunpack.c.l.b16 %v1250
    %v1523 = vunpack.c.h.b16 %v1250
    %v1524 = vunpack.c.l.b16 %v1251
    %v1525 = vunpack.c.h.b16 %v1251
    %v1526 = vunpack.c.l.b16 %v1252
    %v1527 = vunpack.c.h.b16 %v1252
    %v1528 = vunpack.c.l.b16 %v1253
    %v1529 = vunpack.c.h.b16 %v1253
    %v1530 = vunpack.c.l.b16 %v1254
    %v1531 = vunpack.c.h.b16 %v1254
    %v1532 = vunpack.c.l.b16 %v1255
    %v1533 = vunpack.c.h.b16 %v1255
    %v1534 = vunpack.c.l.b16 %v1256
    %v1535 = vunpack.c.h.b16 %v1256
    %v1536 = vunpack.c.l.b16 %v1257
    %v1537 = vunpack.c.h.b16 %v1257
    %v1538 = vunpack.c.l.b16 %v1258
    %v1539 = vunpack.c.h.b16 %v1258
    %v1540 = vunpack.c.l.b16 %v1259
    %v1541 = vunpack.c.h.b16 %v1259
    %v1542 = vunpack.c.l.b16 %v1260
    %v1543 = vunpack.c.h.b16 %v1260
    %v1544 = vunpack.c.l.b16 %v1261
    %v1545 = vunpack.c.h.b16 %v1261
    %v1546 = vunpack.c.l.b16 %v1262
    %v1547 = vunpack.c.h.b16 %v1262
    %v1548 = vunpack.c.l.b16 %v1263
    %v1549 = vunpack.c.h.b16 %v1263
    %v1550 = vunpack.c.l.b16 %v1264
    %v1551 = vunpack.c.h.b16 %v1264
    %v1552 = vunpack.c.l.b16 %v1265
    %v1553 = vunpack.c.h.b16 %v1265
    %v1554 = vunpack.c.l.b16 %v1266
    %v1555 = vunpack.c.h.b16 %v1266
    %v1556 = vunpack.c.l.b16 %v1267
    %v1557 = vunpack.c.h.b16 %v1267
    %v1558 = vunpack.c.l.b16 %v1268
    %v1559 = vunpack.c.h.b16 %v1268
    %v1560 = vunpack.c.l.b16 %v1269
    %v1561 = vunpack.c.h.b16 %v1269
    %v1562 = vunpack.c.l.b16 %v1270
    %v1563 = vunpack.c.h.b16 %v1270
    %v1564 = vunpack.c.l.b16 %v1271
    %v1565 = vunpack.c.h.b16 %v1271
    %v1566 = vunpack.c.l.b16 %v1272
    %v1567 = vunpack.c.h.b16 %v1272
    %v1568 = vunpack.c.l.b16 %v1273
    %v1569 = vunpack.c.h.b16 %v1273
    %v1570 = vunpack.c.l.b16 %v1274
    %v1571 = vunpack.c.h.b16 %v1274
    %v1572 = vunpack.c.l.b16 %v1275
    %v1573 = vunpack.c.h.b16 %v1275
    %v1574 = vunpack.c.l.b16 %v1276
    %v1575 = vunpack.c.h.b16 %v1276
    %v1576 = vunpack.c.l.b16 %v1277
    %v1577 = vunpack.c.h.b16 %v1277
    %v1578 = vunpack.c.l.b16 %v1278
    %v1579 = vunpack.c.h.b16 %v1278
    %v1580 = vunpack.c.l.b16 %v1279
    %v1581 = vunpack.c.h.b16 %v1279
    %v1582 = vunpack.c.l.b16 %v1280
    %v1583 = vunpack.c.h.b16 %v1280
    %v1584 = vunpack.c.l.b16 %v1281
    %v1585 = vunpack.c.h.b16 %v1281
    %v1586 = vunpack.c.l.b16 %v1282
    %v1587 = vunpack.c.h.b16 %v1282
    %v1588 = vunpack.c.l.b16 %v1283
    %v1589 = vunpack.c.h.b16 %v1283
    %v1590 = vunpack.c.l.b16 %v1284
    %v1591 = vunpack.c.h.b16 %v1284
    %v1592 = vunpack.c.l.b16 %v1285
    %v1593 = vunpack.c.h.b16 %v1285
    %v1594 = vunpack.c.l.b16 %v1286
    %v1595 = vunpack.c.h.b16 %v1286
    %v1596 = vunpack.c.l.b16 %v1287
    %v1597 = vunpack.c.h.b16 %v1287
    %v1598 = vunpack.c.l.b16 %v1288
    %v1599 = vunpack.c.h.b16 %v1288
    %v1600 = vunpack.c.l.b16 %v1289
    %v1601 = vunpack.c.h.b16 %v1289
    %v1602 = vunpack.c.l.b16 %v1290
    %v1603 = vunpack.c.h.b16 %v1290
    %v1604 = vunpack.c.l.b16 %v1291
    %v1605 = vunpack.c.h.b16 %v1291
    %v1606 = vunpack.c.l.b16 %v1292
    %v1607 = vunpack.c.h.b16 %v1292
    %v1608 = vunpack.c.l.b16 %v1293
    %v1609 = vunpack.c.h.b16 %v1293
    %v1610 = vunpack.c.l.b16 %v1294
    %v1611 = vunpack.c.h.b16 %v1294
    %v1612 = vunpack.c.l.b16 %v1295
    %v1613 = vunpack.c.h.b16 %v1295
    %v1614 = vunpack.c.l.b16 %v1296
    %v1615 = vunpack.c.h.b16 %v1296
    %v1616 = vunpack.c.l.b16 %v1297
    %v1617 = vunpack.c.h.b16 %v1297
    %v1618 = vunpack.c.l.b16 %v1298
    %v1619 = vunpack.c.h.b16 %v1298
    %v1620 = vunpack.c.l.b16 %v1299
    %v1621 = vunpack.c.h.b16 %v1299
    %v1622 = vunpack.c.l.b16 %v1300
    %v1623 = vunpack.c.h.b16 %v1300
    %v1624 = vunpack.c.l.b16 %v1301
    %v1625 = vunpack.c.h.b16 %v1301
    %v1626 = vunpack.c.l.b16 %v1302
    %v1627 = vunpack.c.h.b16 %v1302
    %v1628 = vunpack.c.l.b16 %v1303
    %v1629 = vunpack.c.h.b16 %v1303
    %v1630 = vunpack.c.l.b16 %v1304
    %v1631 = vunpack.c.h.b16 %v1304
    %v1632 = vunpack.c.l.b16 %v1305
    %v1633 = vunpack.c.h.b16 %v1305
    %v1634 = vunpack.c.l.b16 %v1306
    %v1635 = vunpack.c.h.b16 %v1306
    %v1636 = vunpack.c.l.b16 %v1307
    %v1637 = vunpack.c.h.b16 %v1307
    %v1638 = vunpack.c.l.b16 %v1308
    %v1639 = vunpack.c.h.b16 %v1308
    %v1640 = vunpack.c.l.b16 %v1309
    %v1641 = vunpack.c.h.b16 %v1309
    %v1642 = vunpack.c.l.b16 %v1310
    %v1643 = vunpack.c.h.b16 %v1310
    %v1644 = vunpack.c.l.b16 %v1311
    %v1645 = vunpack.c.h.b16 %v1311
    %v1646 = vunpack.c.l.b16 %v1312
    %v1647 = vunpack.c.h.b16 %v1312
    %v1648 = vunpack.c.l.b16 %v1313
    %v1649 = vunpack.c.h.b16 %v1313
    %v1650 = vunpack.c.l.b16 %v1314
    %v1651 = vunpack.c.h.b16 %v1314
    %v1652 = vunpack.c.l.b16 %v1315
    %v1653 = vunpack.c.h.b16 %v1315
    %v1654 = vunpack.c.l.b16 %v1316
    %v1655 = vunpack.c.h.b16 %v1316
    %v1656 = vunpack.c.l.b16 %v1317
    %v1657 = vunpack.c.h.b16 %v1317
    %v1658 = vunpack.c.l.b16 %v1318
    %v1659 = vunpack.c.h.b16 %v1318
    %v1660 = vunpack.c.l.b16 %v1319
    %v1661 = vunpack.c.h.b16 %v1319
    %v1662 = vunpack.c.l.b16 %v1320
    %v1663 = vunpack.c.h.b16 %v1320
    %v1664 = vunpack.c.l.b16 %v1321
    %v1665 = vunpack.c.h.b16 %v1321
    %v1666 = vunpack.c.l.b16 %v1322
    %v1667 = vunpack.c.h.b16 %v1322
    %v1668 = vunpack.c.l.b16 %v1323
    %v1669 = vunpack.c.h.b16 %v1323
    %v1670 = vunpack.c.l.b16 %v1324
    %v1671 = vunpack.c.h.b16 %v1324
    %v1672 = vunpack.c.l.b16 %v1325
    %v1673 = vunpack.c.h.b16 %v1325
    %v1674 = vunpack.c.l.b16 %v1326
    %v1675 = vunpack.c.h.b16 %v1326
    %v1676 = vunpack.c.l.b16 %v1327
    %v1677 = vunpack.c.h.b16 %v1327
    %v1678 = vunpack.c.l.b16 %v1328
    %v1679 = vunpack.c.h.b16 %v1328
    %v1680 = vunpack.c.l.b16 %v1329
    %v1681 = vunpack.c.h.b16 %v1329
    %v1682 = vunpack.c.l.b16 %v1330
    %v1683 = vunpack.c.h.b16 %v1330
    %v1684 = vunpack.c.l.b16 %v1331
    %v1685 = vunpack.c.h.b16 %v1331
    %v1686 = vunpack.c.l.b16 %v1332
    %v1687 = vunpack.c.h.b16 %v1332
    %v1688 = vunpack.c.l.b16 %v1333
    %v1689 = vunpack.c.h.b16 %v1333
    %v1690 = vunpack.c.l.b16 %v1334
    %v1691 = vunpack.c.h.b16 %v1334
    %v1692 = vunpack.c.l.b16 %v1335
    %v1693 = vunpack.c.h.b16 %v1335
    %v1694 = vunpack.c.l.b16 %v1336
    %v1695 = vunpack.c.h.b16 %v1336
    %v1696 = vunpack.c.l.b16 %v1337
    %v1697 = vunpack.c.h.b16 %v1337
    %v1698 = vunpack.c.l.b16 %v1338
    %v1699 = vunpack.c.h.b16 %v1338
    %v1700 = vunpack.c.l.b16 %v1339
    %v1701 = vunpack.c.h.b16 %v1339
    %v1702 = vunpack.c.l.b16 %v1340
    %v1703 = vunpack.c.h.b16 %v1340
    %v1704 = vunpack.c.l.b16 %v1341
    %v1705 = vunpack.c.h.b16 %v1341
    %v1706 = vunpack.c.l.b16 %v1342
    %v1707 = vunpack.c.h.b16 %v1342
    %v1708 = vunpack.c.l.b16 %v1343
    %v1709 = vunpack.c.h.b16 %v1343
    %v1710 = vunpack.c.l.b16 %v1344
    %v1711 = vunpack.c.h.b16 %v1344
    %v1712 = vunpack.c.l.b16 %v1345
    %v1713 = vunpack.c.h.b16 %v1345
    %v1714 = vunpack.c.l.b16 %v1346
    %v1715 = vunpack.c.h.b16 %v1346
    %v1716 = vunpack.c.l.b16 %v1347
    %v1717 = vunpack.c.h.b16 %v1347
    %v1718 = vunpack.c.l.b16 %v1348
    %v1719 = vunpack.c.h.b16 %v1348
    %v1720 = vunpack.c.l.b16 %v1349
    %v1721 = vunpack.c.h.b16 %v1349
    %v1722 = vunpack.c.l.b16 %v1350
    %v1723 = vunpack.c.h.b16 %v1350
    %v1724 = vunpack.c.l.b16 %v1351
    %v1725 = vunpack.c.h.b16 %v1351
    %v1726 = vunpack.c.l.b16 %v1352
    %v1727 = vunpack.c.h.b16 %v1352
    %v1728 = vunpack.c.l.b16 %v1353
    %v1729 = vunpack.c.h.b16 %v1353
    %v1730 = vunpack.c.l.b16 %v1354
    %v1731 = vunpack.c.h.b16 %v1354
    %v1732 = vunpack.c.l.b16 %v1355
    %v1733 = vunpack.c.h.b16 %v1355
    %v1734 = vunpack.c.l.b16 %v1356
    %v1735 = vunpack.c.h.b16 %v1356
    %v1736 = vunpack.c.l.b16 %v1357
    %v1737 = vunpack.c.h.b16 %v1357
    %v1738 = vunpack.c.l.b16 %v1358
    %v1739 = vunpack.c.h.b16 %v1358
    %v1740 = vunpack.c.l.b16 %v1359
    %v1741 = vunpack.c.h.b16 %v1359
    %v1742 = vunpack.c.l.b16 %v1360
    %v1743 = vunpack.c.h.b16 %v1360
    %v1744 = vunpack.c.l.b16 %v1361
    %v1745 = vunpack.c.h.b16 %v1361
    %v1746 = vunpack.c.l.b16 %v1362
    %v1747 = vunpack.c.h.b16 %v1362
    %v1748 = vunpack.c.l.b16 %v1363
    %v1749 = vunpack.c.h.b16 %v1363
    %v1750 = vunpack.c.l.b16 %v1364
    %v1751 = vunpack.c.h.b16 %v1364
    %v1752 = vunpack.c.l.b16 %v1365
    %v1753 = vunpack.c.h.b16 %v1365
    %v1754 = vunpack.c.l.b16 %v1366
    %v1755 = vunpack.c.h.b16 %v1366
    %v1756 = vunpack.c.l.b16 %v1367
    %v1757 = vunpack.c.h.b16 %v1367
    %v1758 = vpack.c.b16 %v1504, %v1502
    %v1759 = vpack.c.b16 %v1505, %v1503
    %v1760 = vpack.c.b16 %v1508, %v1506
    %v1761 = vpack.c.b16 %v1509, %v1507
    %v1762 = vpack.c.b16 %v1512, %v1510
    %v1763 = vpack.c.b16 %v1513, %v1511
    %v1764 = vpack.c.b16 %v1516, %v1514
    %v1765 = vpack.c.b16 %v1517, %v1515
    %v1766 = vpack.c.b16 %v1520, %v1518
    %v1767 = vpack.c.b16 %v1521, %v1519
    %v1768 = vpack.c.b16 %v1524, %v1522
    %v1769 = vpack.c.b16 %v1525, %v1523
    %v1770 = vpack.c.b16 %v1528, %v1526
    %v1771 = vpack.c.b16 %v1529, %v1527
    %v1772 = vpack.c.b16 %v1532, %v1530
    %v1773 = vpack.c.b16 %v1533, %v1531
    %v1774 = vpack.c.b16 %v1536, %v1534
    %v1775 = vpack.c.b16 %v1537, %v1535
    %v1776 = vpack.c.b16 %v1540, %v1538
    %v1777 = vpack.c.b16 %v1541, %v1539
    %v1778 = vpack.c.b16 %v1544, %v1542
    %v1779 = vpack.c.b16 %v1545, %v1543
    %v1780 = vpack.c.b16 %v1548, %v1546
    %v1781 = vpack.c.b16 %v1549, %v1547
    %v1782 = vpack.c.b16 %v1552, %v1550
    %v1783 = vpack.c.b16 %v1553, %v1551
    %v1784 = vpack.c.b16 %v1556, %v1554
    %v1785 = vpack.c.b16 %v1557, %v1555
    %v1786 = vpack.c.b16 %v1560, %v1558
    %v1787 = vpack.c.b16 %v1561, %v1559
    %v1788 = vpack.c.b16 %v1564, %v1562
    %v1789 = vpack.c.b16 %v1565, %v1563
    %v1790 = vpack.c.b16 %v1568, %v1566
    %v1791 = vpack.c.b16 %v1569, %v1567
    %v1792 = vpack.c.b16 %v1572, %v1570
    %v1793 = vpack.c.b16 %v1573, %v1571
    %v1794 = vpack.c.b16 %v1576, %v1574
    %v1795 = vpack.c.b16 %v1577, %v1575
    %v1796 = vpack.c.b16 %v1580, %v1578
    %v1797 = vpack.c.b16 %v1581, %v1579
    %v1798 = vpack.c.b16 %v1584, %v1582
    %v1799 = vpack.c.b16 %v1585, %v1583
    %v1800 = vpack.c.b16 %v1588, %v1586
    %v1801 = vpack.c.b16 %v1589, %v1587
    %v1802 = vpack.c.b16 %v1592, %v1590
    %v1803 = vpack.c.b16 %v1593, %v1591
    %v1804 = vpack.c.b16 %v1596, %v1594
    %v1805 = vpack.c.b16 %v1597, %v1595
    %v1806 = vpack.c.b16 %v1600, %v1598
    %v1807 = vpack.c.b16 %v1601, %v1599
    %v1808 = vpack.c.b16 %v1604, %v1602
    %v1809 = vpack.c.b16 %v1605, %v1603
    %v1810 = vpack.c.b16 %v1608, %v1606
    %v1811 = vpack.c.b16 %v1609, %v1607
    %v1812 = vpack.c.b16 %v1612, %v1610
    %v1813 = vpack.c.b16 %v1613, %v1611
    %v1814 = vpack.c.b16 %v1616, %v1614
    %v1815 = vpack.c.b16 %v1617, %v1615
    %v1816 = vpack.c.b16 %v1620, %v1618
    %v1817 = vpack.c.b16 %v1621, %v1619
    %v1818 = vpack.c.b16 %v1624, %v1622
    %v1819 = vpack.c.b16 %v1625, %v1623
    %v1820 = vpack.c.b16 %v1628, %v1626
    %v1821 = vpack.c.b16 %v1629, %v1627
    %v1822 = vpack.c.b16 %v1632, %v1630
    %v1823 = vpack.c.b16 %v1633, %v1631
    %v1824 = vpack.c.b16 %v1636, %v1634
    %v1825 = vpack.c.b16 %v1637, %v1635
    %v1826 = vpack.c.b16 %v1640, %v1638
    %v1827 = vpack.c.b16 %v1641, %v1639
    %v1828 = vpack.c.b16 %v1644, %v1642
    %v1829 = vpack.c.b16 %v1645, %v1643
    %v1830 = vpack.c.b16 %v1648, %v1646
    %v1831 = vpack.c.b16 %v1649, %v1647
    %v1832 = vpack.c.b16 %v1652, %v1650
    %v1833 = vpack.c.b16 %v1653, %v1651
    %v1834 = vpack.c.b16 %v1656, %v1654
    %v1835 = vpack.c.b16 %v1657, %v1655
    %v1836 = vpack.c.b16 %v1660, %v1658
    %v1837 = vpack.c.b16 %v1661, %v1659
    %v1838 = vpack.c.b16 %v1664, %v1662
    %v1839 = vpack.c.b16 %v1665, %v1663
    %v1840 = vpack.c.b16 %v1668, %v1666
    %v1841 = vpack.c.b16 %v1669, %v1667
    %v1842 = vpack.c.b16 %v1672, %v1670
    %v1843 = vpack.c.b16 %v1673, %v1671
    %v1844 = vpack.c.b16 %v1676, %v1674
    %v1845 = vpack.c.b16 %v1677, %v1675
    %v1846 = vpack.c.b16 %v1680, %v1678
    %v1847 = vpack.c.b16 %v1681, %v1679
    %v1848 = vpack.c.b16 %v1684, %v1682
    %v1849 = vpack.c.b16 %v1685, %v1683
    %v1850 = vpack.c.b16 %v1688, %v1686
    %v1851 = vpack.c.b16 %v1689, %v1687
    %v1852 = vpack.c.b16 %v1692, %v1690
    %v1853 = vpack.c.b16 %v1693, %v1691
    %v1854 = vpack.c.b16 %v1696, %v1694
    %v1855 = vpack.c.b16 %v1697, %v1695
    %v1856 = vpack.c.b16 %v1700, %v1698
    %v1857 = vpack.c.b16 %v1701, %v1699
    %v1858 = vpack.c.b16 %v1704, %v1702
    %v1859 = vpack.c.b16 %v1705, %v1703
    %v1860 = vpack.c.b16 %v1708, %v1706
    %v1861 = vpack.c.b16 %v1709, %v1707
    %v1862 = vpack.c.b16 %v1712, %v1710
    %v1863 = vpack.c.b16 %v1713, %v1711
    %v1864 = vpack.c.b16 %v1716, %v1714
    %v1865 = vpack.c.b16 %v1717, %v1715
    %v1866 = vpack.c.b16 %v1720, %v1718
    %v1867 = vpack.c.b16 %v1721, %v1719
    %v1868 = vpack.c.b16 %v1724, %v1722
    %v1869 = vpack.c.b16 %v1725, %v1723
    %v1870 = vpack.c.b16 %v1728, %v1726
    %v1871 = vpack.c.b16 %v1729, %v1727
    %v1872 = vpack.c.b16 %v1732, %v1730
    %v1873 = vpack.c.b16 %v1733, %v1731
    %v1874 = vpack.c.b16 %v1736, %v1734
    %v1875 = vpack.c.b16 %v1737, %v1735
    %v1876 = vpack.c.b16 %v1740, %v1738
    %v1877 = vpack.c.b16 %v1741, %v1739
    %v1878 = vpack.c.b16 %v1744, %v1742
    %v1879 = vpack.c.b16 %v1745, %v1743
    %v1880 = vpack.c.b16 %v1748, %v1746
    %v1881 = vpack.c.b16 %v1749, %v1747
    %v1882 = vpack.c.b16 %v1752, %v1750
    %v1883 = vpack.c.b16 %v1753, %v1751
    %v1884 = vpack.c.b16 %v1756, %v1754
    %v1885 = vpack.c.b16 %v1757, %v1755
    %2014 = vmatpush.bf16.msra.mxu0 %v1772
    %2015 = vmatpush.bf16.msra.mxu0 %v1770
    %2016 = vmatpush.bf16.msra.mxu0 %v1768
    %2017 = vmatpush.bf16.msra.mxu0 %v1766
    %2018 = vmatpush.bf16.msra.mxu0 %v1764
    %2019 = vmatpush.bf16.msra.mxu0 %v1762
    %2020 = vmatpush.bf16.msra.mxu0 %v1760
    %2021 = vmatpush.bf16.msra.mxu0 %v1758
    %2022 = vmatmul.bf16.gmra.mxu0 %v1232
    %v2023 = vpop.f32.mrf.mxu0
    %v2024 = vadd.f32 %v1370, %v2023
    %v2025 = vpop.f32.mrf.mxu0
    %v2026 = vadd.f32 %v1370, %v2025
    %2027 = vdwg.mxu0
    %2028 = vmatpush.bf16.msra.mxu0 %v1788
    %2029 = vmatpush.bf16.msra.mxu0 %v1786
    %2030 = vmatpush.bf16.msra.mxu0 %v1784
    %2031 = vmatpush.bf16.msra.mxu0 %v1782
    %2032 = vmatpush.bf16.msra.mxu0 %v1780
    %2033 = vmatpush.bf16.msra.mxu0 %v1778
    %2034 = vmatpush.bf16.msra.mxu0 %v1776
    %2035 = vmatpush.bf16.msra.mxu0 %v1774
    %2036 = vmatmul.bf16.gmra.mxu0 %v1233
    %v2037 = vpop.f32.mrf.mxu0
    %v2038 = vadd.f32 %v2024, %v2037
    %v2039 = vpop.f32.mrf.mxu0
    %v2040 = vadd.f32 %v2026, %v2039
    %2041 = vdwg.mxu0
    %2042 = vmatpush.bf16.msra.mxu0 %v1804
    %2043 = vmatpush.bf16.msra.mxu0 %v1802
    %2044 = vmatpush.bf16.msra.mxu0 %v1800
    %2045 = vmatpush.bf16.msra.mxu0 %v1798
    %2046 = vmatpush.bf16.msra.mxu0 %v1796
    %2047 = vmatpush.bf16.msra.mxu0 %v1794
    %2048 = vmatpush.bf16.msra.mxu0 %v1792
    %2049 = vmatpush.bf16.msra.mxu0 %v1790
    %2050 = vmatmul.bf16.gmra.mxu0 %v1234
    %v2051 = vpop.f32.mrf.mxu0
    %v2052 = vadd.f32 %v2038, %v2051
    %v2053 = vpop.f32.mrf.mxu0
    %v2054 = vadd.f32 %v2040, %v2053
    %2055 = vdwg.mxu0
    %2056 = vmatpush.bf16.msra.mxu0 %v1820
    %2057 = vmatpush.bf16.msra.mxu0 %v1818
    %2058 = vmatpush.bf16.msra.mxu0 %v1816
    %2059 = vmatpush.bf16.msra.mxu0 %v1814
    %2060 = vmatpush.bf16.msra.mxu0 %v1812
    %2061 = vmatpush.bf16.msra.mxu0 %v1810
    %2062 = vmatpush.bf16.msra.mxu0 %v1808
    %2063 = vmatpush.bf16.msra.mxu0 %v1806
    %2064 = vmatmul.bf16.gmra.mxu0 %v1235
    %v2065 = vpop.f32.mrf.mxu0
    %v2066 = vadd.f32 %v2052, %v2065
    %v2067 = vpop.f32.mrf.mxu0
    %v2068 = vadd.f32 %v2054, %v2067
    %2069 = vdwg.mxu0
    %2070 = vmatpush.bf16.msra.mxu0 %v1836
    %2071 = vmatpush.bf16.msra.mxu0 %v1834
    %2072 = vmatpush.bf16.msra.mxu0 %v1832
    %2073 = vmatpush.bf16.msra.mxu0 %v1830
    %2074 = vmatpush.bf16.msra.mxu0 %v1828
    %2075 = vmatpush.bf16.msra.mxu0 %v1826
    %2076 = vmatpush.bf16.msra.mxu0 %v1824
    %2077 = vmatpush.bf16.msra.mxu0 %v1822
    %2078 = vmatmul.bf16.gmra.mxu0 %v1236
    %v2079 = vpop.f32.mrf.mxu0
    %v2080 = vadd.f32 %v2066, %v2079
    %v2081 = vpop.f32.mrf.mxu0
    %v2082 = vadd.f32 %v2068, %v2081
    %2083 = vdwg.mxu0
    %2084 = vmatpush.bf16.msra.mxu0 %v1852
    %2085 = vmatpush.bf16.msra.mxu0 %v1850
    %2086 = vmatpush.bf16.msra.mxu0 %v1848
    %2087 = vmatpush.bf16.msra.mxu0 %v1846
    %2088 = vmatpush.bf16.msra.mxu0 %v1844
    %2089 = vmatpush.bf16.msra.mxu0 %v1842
    %2090 = vmatpush.bf16.msra.mxu0 %v1840
    %2091 = vmatpush.bf16.msra.mxu0 %v1838
    %2092 = vmatmul.bf16.gmra.mxu0 %v1237
    %v2093 = vpop.f32.mrf.mxu0
    %v2094 = vadd.f32 %v2080, %v2093
    %v2095 = vpop.f32.mrf.mxu0
    %v2096 = vadd.f32 %v2082, %v2095
    %2097 = vdwg.mxu0
    %2098 = vmatpush.bf16.msra.mxu0 %v1868
    %2099 = vmatpush.bf16.msra.mxu0 %v1866
    %2100 = vmatpush.bf16.msra.mxu0 %v1864
    %2101 = vmatpush.bf16.msra.mxu0 %v1862
    %2102 = vmatpush.bf16.msra.mxu0 %v1860
    %2103 = vmatpush.bf16.msra.mxu0 %v1858
    %2104 = vmatpush.bf16.msra.mxu0 %v1856
    %2105 = vmatpush.bf16.msra.mxu0 %v1854
    %2106 = vmatmul.bf16.gmra.mxu0 %v1238
    %v2107 = vpop.f32.mrf.mxu0
    %v2108 = vadd.f32 %v2094, %v2107
    %v2109 = vpop.f32.mrf.mxu0
    %v2110 = vadd.f32 %v2096, %v2109
    %2111 = vdwg.mxu0
    %2112 = vmatpush.bf16.msra.mxu0 %v1884
    %2113 = vmatpush.bf16.msra.mxu0 %v1882
    %2114 = vmatpush.bf16.msra.mxu0 %v1880
    %2115 = vmatpush.bf16.msra.mxu0 %v1878
    %2116 = vmatpush.bf16.msra.mxu0 %v1876
    %2117 = vmatpush.bf16.msra.mxu0 %v1874
    %2118 = vmatpush.bf16.msra.mxu0 %v1872
    %2119 = vmatpush.bf16.msra.mxu0 %v1870
    %2120 = vmatmul.bf16.gmra.mxu0 %v1239
    %v2121 = vpop.f32.mrf.mxu0
    %v2122 = vadd.f32 %v2108, %v2121
    %v2123 = vpop.f32.mrf.mxu0
    %v2124 = vadd.f32 %v2110, %v2123
    %2125 = vdwg.mxu0
    %2126 = vmatpush.bf16.msra.mxu0 %v1773
    %2127 = vmatpush.bf16.msra.mxu0 %v1771
    %2128 = vmatpush.bf16.msra.mxu0 %v1769
    %2129 = vmatpush.bf16.msra.mxu0 %v1767
    %2130 = vmatpush.bf16.msra.mxu0 %v1765
    %2131 = vmatpush.bf16.msra.mxu0 %v1763
    %2132 = vmatpush.bf16.msra.mxu0 %v1761
    %2133 = vmatpush.bf16.msra.mxu0 %v1759
    %2134 = vmatmul.bf16.gmra.mxu0 %v1232
    %v2135 = vpop.f32.mrf.mxu0
    %v2136 = vadd.f32 %v1371, %v2135
    %v2137 = vpop.f32.mrf.mxu0
    %v2138 = vadd.f32 %v1371, %v2137
    %2139 = vdwg.mxu0
    %2140 = vmatpush.bf16.msra.mxu0 %v1789
    %2141 = vmatpush.bf16.msra.mxu0 %v1787
    %2142 = vmatpush.bf16.msra.mxu0 %v1785
    %2143 = vmatpush.bf16.msra.mxu0 %v1783
    %2144 = vmatpush.bf16.msra.mxu0 %v1781
    %2145 = vmatpush.bf16.msra.mxu0 %v1779
    %2146 = vmatpush.bf16.msra.mxu0 %v1777
    %2147 = vmatpush.bf16.msra.mxu0 %v1775
    %2148 = vmatmul.bf16.gmra.mxu0 %v1233
    %v2149 = vpop.f32.mrf.mxu0
    %v2150 = vadd.f32 %v2136, %v2149
    %v2151 = vpop.f32.mrf.mxu0
    %v2152 = vadd.f32 %v2138, %v2151
    %2153 = vdwg.mxu0
    %2154 = vmatpush.bf16.msra.mxu0 %v1805
    %2155 = vmatpush.bf16.msra.mxu0 %v1803
    %2156 = vmatpush.bf16.msra.mxu0 %v1801
    %2157 = vmatpush.bf16.msra.mxu0 %v1799
    %2158 = vmatpush.bf16.msra.mxu0 %v1797
    %2159 = vmatpush.bf16.msra.mxu0 %v1795
    %2160 = vmatpush.bf16.msra.mxu0 %v1793
    %2161 = vmatpush.bf16.msra.mxu0 %v1791
    %2162 = vmatmul.bf16.gmra.mxu0 %v1234
    %v2163 = vpop.f32.mrf.mxu0
    %v2164 = vadd.f32 %v2150, %v2163
    %v2165 = vpop.f32.mrf.mxu0
    %v2166 = vadd.f32 %v2152, %v2165
    %2167 = vdwg.mxu0
    %2168 = vmatpush.bf16.msra.mxu0 %v1821
    %2169 = vmatpush.bf16.msra.mxu0 %v1819
    %2170 = vmatpush.bf16.msra.mxu0 %v1817
    %2171 = vmatpush.bf16.msra.mxu0 %v1815
    %2172 = vmatpush.bf16.msra.mxu0 %v1813
    %2173 = vmatpush.bf16.msra.mxu0 %v1811
    %2174 = vmatpush.bf16.msra.mxu0 %v1809
    %2175 = vmatpush.bf16.msra.mxu0 %v1807
    %2176 = vmatmul.bf16.gmra.mxu0 %v1235
    %v2177 = vpop.f32.mrf.mxu0
    %v2178 = vadd.f32 %v2164, %v2177
    %v2179 = vpop.f32.mrf.mxu0
    %v2180 = vadd.f32 %v2166, %v2179
    %2181 = vdwg.mxu0
    %2182 = vmatpush.bf16.msra.mxu0 %v1837
    %2183 = vmatpush.bf16.msra.mxu0 %v1835
    %2184 = vmatpush.bf16.msra.mxu0 %v1833
    %2185 = vmatpush.bf16.msra.mxu0 %v1831
    %2186 = vmatpush.bf16.msra.mxu0 %v1829
    %2187 = vmatpush.bf16.msra.mxu0 %v1827
    %2188 = vmatpush.bf16.msra.mxu0 %v1825
    %2189 = vmatpush.bf16.msra.mxu0 %v1823
    %2190 = vmatmul.bf16.gmra.mxu0 %v1236
    %v2191 = vpop.f32.mrf.mxu0
    %v2192 = vadd.f32 %v2178, %v2191
    %v2193 = vpop.f32.mrf.mxu0
    %v2194 = vadd.f32 %v2180, %v2193
    %2195 = vdwg.mxu0
    %2196 = vmatpush.bf16.msra.mxu0 %v1853
    %2197 = vmatpush.bf16.msra.mxu0 %v1851
    %2198 = vmatpush.bf16.msra.mxu0 %v1849
    %2199 = vmatpush.bf16.msra.mxu0 %v1847
    %2200 = vmatpush.bf16.msra.mxu0 %v1845
    %2201 = vmatpush.bf16.msra.mxu0 %v1843
    %2202 = vmatpush.bf16.msra.mxu0 %v1841
    %2203 = vmatpush.bf16.msra.mxu0 %v1839
    %2204 = vmatmul.bf16.gmra.mxu0 %v1237
    %v2205 = vpop.f32.mrf.mxu0
    %v2206 = vadd.f32 %v2192, %v2205
    %v2207 = vpop.f32.mrf.mxu0
    %v2208 = vadd.f32 %v2194, %v2207
    %2209 = vdwg.mxu0
    %2210 = vmatpush.bf16.msra.mxu0 %v1869
    %2211 = vmatpush.bf16.msra.mxu0 %v1867
    %2212 = vmatpush.bf16.msra.mxu0 %v1865
    %2213 = vmatpush.bf16.msra.mxu0 %v1863
    %2214 = vmatpush.bf16.msra.mxu0 %v1861
    %2215 = vmatpush.bf16.msra.mxu0 %v1859
    %2216 = vmatpush.bf16.msra.mxu0 %v1857
    %2217 = vmatpush.bf16.msra.mxu0 %v1855
    %2218 = vmatmul.bf16.gmra.mxu0 %v1238
    %v2219 = vpop.f32.mrf.mxu0
    %v2220 = vadd.f32 %v2206, %v2219
    %v2221 = vpop.f32.mrf.mxu0
    %v2222 = vadd.f32 %v2208, %v2221
    %2223 = vdwg.mxu0
    %2224 = vmatpush.bf16.msra.mxu0 %v1885
    %2225 = vmatpush.bf16.msra.mxu0 %v1883
    %2226 = vmatpush.bf16.msra.mxu0 %v1881
    %2227 = vmatpush.bf16.msra.mxu0 %v1879
    %2228 = vmatpush.bf16.msra.mxu0 %v1877
    %2229 = vmatpush.bf16.msra.mxu0 %v1875
    %2230 = vmatpush.bf16.msra.mxu0 %v1873
    %2231 = vmatpush.bf16.msra.mxu0 %v1871
    %2232 = vmatmul.bf16.gmra.mxu0 %v1239
    %v2233 = vpop.f32.mrf.mxu0
    %v2234 = vadd.f32 %v2220, %v2233
    %v2235 = vpop.f32.mrf.mxu0
    %v2236 = vadd.f32 %v2222, %v2235
    %2237 = vdwg.mxu0
    %v2238 = vmax.f32 %v2122, 0.0
    %v2239 = vmax.f32 %v2234, 0.0
    %v2240 = vmax.f32 %v2124, 0.0
    %v2241 = vmax.f32 %v2236, 0.0
    %v2242 = vpack.c.bf16 %v2240, %v2238
    %v2243 = vpack.c.bf16 %v2241, %v2239
    %v2244 = vld [vmem:[%s9] sm:$0xf]
    %v2245 = vld [vmem:[%s9 + $0x4] sm:$0xf]
    %v2246 = vld [vmem:[%s9 + $0x8] sm:$0xf]
    %v2247 = vld [vmem:[%s9 + $0xc] sm:$0xf]
    %v2248 = vld [vmem:[%s9 + $0x10] sm:$0xf]
    %v2249 = vld [vmem:[%s9 + $0x14] sm:$0xf]
    %v2250 = vld [vmem:[%s9 + $0x18] sm:$0xf]
    %v2251 = vld [vmem:[%s9 + $0x1c] sm:$0xf]
    %v2252 = vld [vmem:[%s9 + $0x20] sm:$0xf]
    %v2253 = vld [vmem:[%s9 + $0x24] sm:$0xf]
    %v2254 = vld [vmem:[%s9 + $0x28] sm:$0xf]
    %v2255 = vld [vmem:[%s9 + $0x2c] sm:$0xf]
    %v2256 = vld [vmem:[%s9 + $0x30] sm:$0xf]
    %v2257 = vld [vmem:[%s9 + $0x34] sm:$0xf]
    %v2258 = vld [vmem:[%s9 + $0x38] sm:$0xf]
    %v2259 = vld [vmem:[%s9 + $0x3c] sm:$0xf]
    %v2260 = vld [vmem:[%s9 + $0x40] sm:$0xf]
    %v2261 = vld [vmem:[%s9 + $0x44] sm:$0xf]
    %v2262 = vld [vmem:[%s9 + $0x48] sm:$0xf]
    %v2263 = vld [vmem:[%s9 + $0x4c] sm:$0xf]
    %v2264 = vld [vmem:[%s9 + $0x50] sm:$0xf]
    %v2265 = vld [vmem:[%s9 + $0x54] sm:$0xf]
    %v2266 = vld [vmem:[%s9 + $0x58] sm:$0xf]
    %v2267 = vld [vmem:[%s9 + $0x5c] sm:$0xf]
    %v2268 = vld [vmem:[%s9 + $0x60] sm:$0xf]
    %v2269 = vld [vmem:[%s9 + $0x64] sm:$0xf]
    %v2270 = vld [vmem:[%s9 + $0x68] sm:$0xf]
    %v2271 = vld [vmem:[%s9 + $0x6c] sm:$0xf]
    %v2272 = vld [vmem:[%s9 + $0x70] sm:$0xf]
    %v2273 = vld [vmem:[%s9 + $0x74] sm:$0xf]
    %v2274 = vld [vmem:[%s9 + $0x78] sm:$0xf]
    %v2275 = vld [vmem:[%s9 + $0x7c] sm:$0xf]
    %v2276 = vld [vmem:[%s10] sm:$0x1]
    %v2278 = vperm.slane %v2276, 0
    %v2312 = vunpack.c.l.b16 %v2244
    %v2313 = vunpack.c.l.b16 %v2245
    %v2314 = vunpack.c.l.b16 %v2246
    %v2315 = vunpack.c.l.b16 %v2247
    %v2316 = vunpack.c.l.b16 %v2248
    %v2317 = vunpack.c.l.b16 %v2249
    %v2318 = vunpack.c.l.b16 %v2250
    %v2319 = vunpack.c.l.b16 %v2251
    %v2320 = vunpack.c.l.b16 %v2252
    %v2321 = vunpack.c.l.b16 %v2253
    %v2322 = vunpack.c.l.b16 %v2254
    %v2323 = vunpack.c.l.b16 %v2255
    %v2324 = vunpack.c.l.b16 %v2256
    %v2325 = vunpack.c.l.b16 %v2257
    %v2326 = vunpack.c.l.b16 %v2258
    %v2327 = vunpack.c.l.b16 %v2259
    %v2328 = vunpack.c.l.b16 %v2260
    %v2329 = vunpack.c.l.b16 %v2261
    %v2330 = vunpack.c.l.b16 %v2262
    %v2331 = vunpack.c.l.b16 %v2263
    %v2332 = vunpack.c.l.b16 %v2264
    %v2333 = vunpack.c.l.b16 %v2265
    %v2334 = vunpack.c.l.b16 %v2266
    %v2335 = vunpack.c.l.b16 %v2267
    %v2336 = vunpack.c.l.b16 %v2268
    %v2337 = vunpack.c.l.b16 %v2269
    %v2338 = vunpack.c.l.b16 %v2270
    %v2339 = vunpack.c.l.b16 %v2271
    %v2340 = vunpack.c.l.b16 %v2272
    %v2341 = vunpack.c.l.b16 %v2273
    %v2342 = vunpack.c.l.b16 %v2274
    %v2343 = vunpack.c.l.b16 %v2275
    %v2344 = vpack.c.b16 %v2313, %v2312
    %v2345 = vpack.c.b16 %v2315, %v2314
    %v2346 = vpack.c.b16 %v2317, %v2316
    %v2347 = vpack.c.b16 %v2319, %v2318
    %v2348 = vpack.c.b16 %v2321, %v2320
    %v2349 = vpack.c.b16 %v2323, %v2322
    %v2350 = vpack.c.b16 %v2325, %v2324
    %v2351 = vpack.c.b16 %v2327, %v2326
    %v2352 = vpack.c.b16 %v2329, %v2328
    %v2353 = vpack.c.b16 %v2331, %v2330
    %v2354 = vpack.c.b16 %v2333, %v2332
    %v2355 = vpack.c.b16 %v2335, %v2334
    %v2356 = vpack.c.b16 %v2337, %v2336
    %v2357 = vpack.c.b16 %v2339, %v2338
    %v2358 = vpack.c.b16 %v2341, %v2340
    %v2359 = vpack.c.b16 %v2343, %v2342
    %2376 = vmatpush.bf16.msra.mxu0 %v2351
    %2377 = vmatpush.bf16.msra.mxu0 %v2350
    %2378 = vmatpush.bf16.msra.mxu0 %v2349
    %2379 = vmatpush.bf16.msra.mxu0 %v2348
    %2380 = vmatpush.bf16.msra.mxu0 %v2347
    %2381 = vmatpush.bf16.msra.mxu0 %v2346
    %2382 = vmatpush.bf16.msra.mxu0 %v2345
    %2383 = vmatpush.bf16.msra.mxu0 %v2344
    %2384 = vmatmul.bf16.gmra.mxu0 %v2242
    %v2385 = vpop.f32.mrf.mxu0
    %v2386 = vadd.f32 %v2278, %v2385
    %v2387 = vpop.f32.mrf.mxu0
    %v2388 = vadd.f32 %v2278, %v2387
    %2389 = vdwg.mxu0
    %2390 = vmatpush.bf16.msra.mxu0 %v2359
    %2391 = vmatpush.bf16.msra.mxu0 %v2358
    %2392 = vmatpush.bf16.msra.mxu0 %v2357
    %2393 = vmatpush.bf16.msra.mxu0 %v2356
    %2394 = vmatpush.bf16.msra.mxu0 %v2355
    %2395 = vmatpush.bf16.msra.mxu0 %v2354
    %2396 = vmatpush.bf16.msra.mxu0 %v2353
    %2397 = vmatpush.bf16.msra.mxu0 %v2352
    %2398 = vmatmul.bf16.gmra.mxu0 %v2243
    %v2399 = vpop.f32.mrf.mxu0
    %v2400 = vadd.f32 %v2386, %v2399
    %v2401 = vpop.f32.mrf.mxu0
    %v2402 = vadd.f32 %v2388, %v2401
    %2403 = vdwg.mxu0
    %v2404 = vmax.f32 %v2400, 0.0
    %v2405 = vmax.f32 %v2402, 0.0
    %v2406 = vpack.c.bf16 %v2405, %v2404
    %v2407 = vld [vmem:[%s11] sm:$0xf]
    %v2408 = vld [vmem:[%s11 + $0x4] sm:$0xf]
    %v2409 = vld [vmem:[%s11 + $0x8] sm:$0xf]
    %v2410 = vld [vmem:[%s11 + $0xc] sm:$0xf]
    %v2411 = vld [vmem:[%s11 + $0x10] sm:$0xf]
    %v2412 = vld [vmem:[%s11 + $0x14] sm:$0xf]
    %v2413 = vld [vmem:[%s11 + $0x18] sm:$0xf]
    %v2414 = vld [vmem:[%s11 + $0x1c] sm:$0xf]
    %v2415 = vld [vmem:[%s12] sm:$0x1]
    %v2417 = vperm.slane %v2415, 0
    %v2427 = vunpack.c.l.b16 %v2407
    %v2428 = vunpack.c.l.b16 %v2408
    %v2429 = vunpack.c.l.b16 %v2409
    %v2430 = vunpack.c.l.b16 %v2410
    %v2431 = vunpack.c.l.b16 %v2411
    %v2432 = vunpack.c.l.b16 %v2412
    %v2433 = vunpack.c.l.b16 %v2413
    %v2434 = vunpack.c.l.b16 %v2414
    %v2435 = vpack.c.b16 %v2428, %v2427
    %v2436 = vpack.c.b16 %v2430, %v2429
    %v2437 = vpack.c.b16 %v2432, %v2431
    %v2438 = vpack.c.b16 %v2434, %v2433
    %v2444 = vsel %vm168, %v2406, 0
    %2446 = vmatpush.bf16.msra.mxu0 0
    %2447 = vmatpush.bf16.msra.mxu0 0
    %2448 = vmatpush.bf16.msra.mxu0 0
    %2449 = vmatpush.bf16.msra.mxu0 0
    %2450 = vmatpush.bf16.msra.mxu0 %v2438
    %2451 = vmatpush.bf16.msra.mxu0 %v2437
    %2452 = vmatpush.bf16.msra.mxu0 %v2436
    %2453 = vmatpush.bf16.msra.mxu0 %v2435
    %2454 = vmatmul.bf16.gmra.mxu0 %v2444
    %v2455 = vpop.f32.mrf.mxu0
    %v2456 = vadd.f32 %v2417, %v2455
    %v2457 = vpop.f32.mrf.mxu0
    %v2458 = vadd.f32 %v2417, %v2457
    %2459 = vdwg.mxu0
    %v2460 = vxor.u32 %v2456, 2147483648
    %v2461 = vxor.u32 %v2458, 2147483648
    %v2462 = vmul.f32 %v2460, 1.442695
    %v2463 = vpow.pop %v2462
    %v2464 = vmul.f32 %v2461, 1.442695
    %v2465 = vpow.pop %v2464
    %v2466 = vadd.f32 %v2463, 1.0
    %v2467 = vadd.f32 %v2465, 1.0
    %v2468 = vrcp.pop %v2466
    %v2469 = vmul.f32 %v2466, %v2468
    %v2470 = vsub.f32 1.0, %v2469
    %v2471 = vmul.f32 %v2468, %v2470
    %v2472 = vadd.f32 %v2468, %v2471
    %vm2473 = vweird.f32 %v2466
    %vm2474 = vweird.f32 %v2468
    %vm2475 = vmor %vm2473, %vm2474
    %v2476 = vsel %vm2475, %v2468, %v2472
    %v2477 = vand.u32 2147483647, %v2466
    %vm2478 = vcmp.eq.f32.partialorder %v2477, 8.507059e+37
    %v2479 = vand.u32 %v2466, 2147483648
    %v2480 = vor.u32 1.1754944e-38, %v2479
    %v2481 = vsel %vm2478, %v2480, %v2476
    %v2482 = vmul.f32 1.0, %v2481
    %v2483 = vrcp.pop %v2467
    %v2484 = vmul.f32 %v2467, %v2483
    %v2485 = vsub.f32 1.0, %v2484
    %v2486 = vmul.f32 %v2483, %v2485
    %v2487 = vadd.f32 %v2483, %v2486
    %vm2488 = vweird.f32 %v2467
    %vm2489 = vweird.f32 %v2483
    %vm2490 = vmor %vm2488, %vm2489
    %v2491 = vsel %vm2490, %v2483, %v2487
    %v2492 = vand.u32 2147483647, %v2467
    %vm2493 = vcmp.eq.f32.partialorder %v2492, 8.507059e+37
    %v2494 = vand.u32 %v2467, 2147483648
    %v2495 = vor.u32 1.1754944e-38, %v2494
    %v2496 = vsel %vm2493, %v2495, %v2491
    %v2497 = vmul.f32 1.0, %v2496
    %2498 = vst [vmem:[#allocation7] sm:$0xff] %v2482
    %2499 = vst [vmem:[#allocation7 + $0x8] sm:$0xff] %v2497
    // Predicated region
    $region62: #{tpu_custom_call.1} parent=1 // pred_check
      _
    $region63: #{tpu_custom_call.1} parent=1 // pred_check_branch
      %2501 = sbr.rel (0) target = $region65
    $region64: #{tpu_custom_call.1} parent=1 // pred_region
      %2503 = vsyncadd [#allocation4], 0
      %s2504 = sshll.u32 [#allocation7], 4
      %s2505 = int_to_ptr.vmem [resolvable:$true] %s2504
      %s2506 = sshll.u32 %s13, 4
      %s2507 = int_to_ptr.hbm [resolvable:$true] %s2506
      %2512 = dma.vmem_to_hbm [thread:$0]  %s2505, 256, %s2507, [#allocation4], 128, 128, 8
    $region65: #{tpu_custom_call.1} parent=1 // pred_fallthru
      _
    // Predicated region
    $region66: #{tpu_custom_call.1} parent=1 // pred_check
      _
    $region67: #{tpu_custom_call.1} parent=1 // pred_check_branch
      %2514 = sbr.rel (0) target = $region69
    $region68: #{tpu_custom_call.1} parent=1 // pred_region
      %2516 = dma.done [#allocation4], 256
    $region69: #{tpu_custom_call.1} parent=1 // pred_fallthru
      _
    %2517 = vsyncpa [#allocation3], 1
    %2518 = vsyncpa [#allocation6], 1
    %2519 = vsyncpa [#allocation4], 1

</llo_original>
